<compile_context>
chip_gen: v7x
topology: tpu7x:2x2x1
jax: 0.10.0
libtpu: 0.0.40
codegen_flags: <defaults>
</compile_context>

<pallas_src>
import functools

import jax
import jax.numpy as jnp
from jax.experimental import pallas as pl
from jax.experimental.pallas import tpu as pltpu


# (dh, dw) taps of a 3x3 / stride-1 / pad-1 window, row-major.
_TAPS = tuple((dh, dw) for dh in (-1, 0, 1) for dw in (-1, 0, 1))


# --------------------------- in-kernel lane rotate ---------------------------

def _make_rot(lf, use_pltpu_roll):
    """Returns rot(v, d) with rot(v, d)[:, p] == v[:, (p + d) % lf].

    Circular wrap-around (row / image boundaries) is handled by the validity
    masks in the kernel, so a plain rotation is sufficient.
    """
    if use_pltpu_roll:
        def rot(v, d):
            s = (-d) % lf
            return v if s == 0 else pltpu.roll(v, s, axis=1)
    else:
        # Fallback: jnp.roll-equivalent rotate built from two static lane
        # slices (stays in vregs, no VMEM scratch).
        def rot(v, d):
            s = (-d) % lf
            if s == 0:
                return v
            return jnp.concatenate([v[:, lf - s:], v[:, :lf - s]], axis=1)
    return rot


def _pltpu_roll_is_usable(lf, shifts):
    """Pre-flight: check pltpu.roll lowers and matches jnp.roll for our shifts."""
    try:
        x = jnp.arange(8 * lf, dtype=jnp.float32).reshape(8, lf)

        def kern(x_ref, o_ref):
            xv = x_ref[...]
            for i, s in enumerate(shifts):
                o_ref[i] = pltpu.roll(xv, s, axis=1)

        out = pl.pallas_call(
            kern,
            out_shape=jax.ShapeDtypeStruct((len(shifts), 8, lf), jnp.float32),
        )(x)
        out = jax.block_until_ready(out)
        ref = jnp.stack([jnp.roll(x, s, axis=1) for s in shifts])
        return bool(jnp.array_equal(out, ref))
    except Exception:
        return False


# ------------------------------ Pallas kernel -------------------------------

def _inception_kernel(x_ref, m_ref,
                      wa_ref, sa_ref, ba_ref,
                      wb_ref, sb_ref, bb_ref,
                      o_ref,
                      *, W, c1, rot):
    """Nb images per grid step, channels-first flattened layout (C, Nb*H*W)."""
    x = x_ref[...]                                            # (cin, Lf) f32

    # --- stage 1: the three 1x1 convs that read x, fused into one MXU matmul.
    # Channel order of ya: [c1 (branch1) | c2 (branch2 1x1) | c4 (branch3 1x1)].
    ya = jnp.dot(wa_ref[...], x.astype(jnp.bfloat16),
                 preferred_element_type=jnp.float32)
    ya = jnp.maximum(ya * sa_ref[...] + ba_ref[...], 0.0)
    o_ref[:c1, :] = ya[:c1].astype(o_ref.dtype)               # branch1 -> out[:c1]
    mid = ya[c1:]                                             # (c2+c4, Lf)

    # --- 3x3 window taps via lane rolls + precomputed validity masks ---------
    # (no padded scratch, no per-step fills, no lane-unaligned loads).
    parts = []
    pool = x                                                  # max-pool centre tap
    for ti, (dh, dw) in enumerate(_TAPS):
        d = dh * W + dw
        if d == 0:
            parts.append(mid)
            continue
        mrow = m_ref[ti:ti + 1, :]                            # (1, Lf), 0/1 f32
        parts.append(rot(mid, d) * mrow)                      # zero outside image
        pool = jnp.maximum(pool, jnp.where(mrow > 0.5, rot(x, d), x))
    parts.append(pool)                                        # branch4 pooled input

    # --- stage 2: merged (branch2 3x3 | branch3 3x3 | branch4 1x1-on-pool) ---
    # Block-structured weight, K = 9*(c2+c4) + cin; output rows [c3 | c5 | c6].
    # NOTE: for real Inception channel counts (e.g. c2+c4 ~ 112), do NOT
    # materialize the full im2col in vregs — stage `patches` through a VMEM
    # scratch or split into a few accumulating dots instead.
    patches = jnp.concatenate(parts, axis=0)                  # (K, Lf) f32
    yb = jnp.dot(wb_ref[...], patches.astype(jnp.bfloat16),
                 preferred_element_type=jnp.float32)
    yb = jnp.maximum(yb * sb_ref[...] + bb_ref[...], 0.0)
    o_ref[c1:, :] = yb.astype(o_ref.dtype)                    # [c3 | c5 | c6]


# --------------------------------- wrapper -----------------------------------

@functools.partial(jax.jit, static_argnames=("dims", "nb", "use_roll"))
def inception_forward(x_nchw, packed, *, dims, nb, use_roll):
    c1, c2, c3, c4, c5, c6 = dims
    N, cin, H, W = x_nchw.shape
    L = H * W
    assert N % nb == 0, (N, nb)
    G = N // nb                 # grid steps (>= 2 keeps both v7x TCs busy)
    Lf = nb * L                 # lane extent per step (multiple of 128 here)
    ctot = c1 + c3 + c5 + c6
    cA = c1 + c2 + c4
    cB = c3 + c5 + c6
    K = 9 * (c2 + c4) + cin

    # Batch folded into the lane axis: NCHW -> (G, cin, Nb*H*W). One XLA
    # transpose; the kernel then sees lane-dense (C, Lf) tiles.
    x_f = x_nchw.reshape(G, nb, cin, L).transpose(0, 2, 1, 3).reshape(G, cin, Lf)

    # Per-tap validity mask (9, Lf): handles row wrap-around, top/bottom rows
    # and cross-image pulls of the circular rolls. Constant-folded at trace.
    pos = jnp.arange(Lf, dtype=jnp.int32) % L
    hi, wi = pos // W, pos % W
    rows = []
    for dh, dw in _TAPS:
        ok = jnp.ones((Lf,), jnp.bool_)
        if dh == -1:
            ok = ok & (hi >= 1)
        if dh == 1:
            ok = ok & (hi <= H - 2)
        if dw == -1:
            ok = ok & (wi >= 1)
        if dw == 1:
            ok = ok & (wi <= W - 2)
        rows.append(ok)
    mask = jnp.stack(rows).astype(jnp.float32)                 # (9, Lf)

    kernel = functools.partial(_inception_kernel, W=W, c1=c1,
                               rot=_make_rot(Lf, use_roll))
    const = lambda g: (0, 0)    # weights / masks: VMEM-resident across steps

    cost = pl.CostEstimate(
        flops=2 * G * Lf * (cA * cin + cB * K) + 30 * G * Lf * ctot,
        transcendentals=0,
        bytes_accessed=int(x_f.size * 4 + G * ctot * Lf * 4 + mask.size * 4
                           + sum(int(v.size) * v.dtype.itemsize
                                 for v in packed.values())))

    out_f = pl.pallas_call(
        kernel,
        out_shape=jax.ShapeDtypeStruct((G, ctot, Lf), jnp.float32),
        grid=(G,),
        in_specs=[
            pl.BlockSpec((None, cin, Lf), lambda g: (g, 0, 0)),
            pl.BlockSpec(mask.shape, const),
            pl.BlockSpec(packed["wA"].shape, const),
            pl.BlockSpec(packed["sA"].shape, const),
            pl.BlockSpec(packed["bA"].shape, const),
            pl.BlockSpec(packed["wB"].shape, const),
            pl.BlockSpec(packed["sB"].shape, const),
            pl.BlockSpec(packed["bB"].shape, const),
        ],
        out_specs=pl.BlockSpec((None, ctot, Lf), lambda g: (g, 0, 0)),
        compiler_params=pltpu.CompilerParams(
            dimension_semantics=("parallel",)),
        cost_estimate=cost,
    )(x_f, mask, packed["wA"], packed["sA"], packed["bA"],
      packed["wB"], packed["sB"], packed["bB"])

    # (G, ctot, Nb*L) -> NCHW, matching torch.cat(dim=1).
    return (out_f.reshape(G, ctot, nb, L).transpose(0, 2, 1, 3)
            .reshape(N, ctot, H, W))


# --------------------------- parameter handling ------------------------------

_BN_EPS = 1e-3


def init_basic_conv(key, cin, cout, k):
    """Synthetic params for Conv2d(bias=False) + BatchNorm2d (inference mode)."""
    kw_, kg, kb, km, kv = jax.random.split(key, 5)
    w = jax.random.normal(kw_, (k, k, cin, cout), jnp.float32) * 0.1   # HWIO
    gamma = 1.0 + 0.1 * jax.random.normal(kg, (cout,), jnp.float32)
    beta = 0.1 * jax.random.normal(kb, (cout,), jnp.float32)
    r_mean = 0.1 * jax.random.normal(km, (cout,), jnp.float32)
    r_var = jax.random.uniform(kv, (cout,), jnp.float32, 0.5, 1.5)
    scale = gamma / jnp.sqrt(r_var + _BN_EPS)
    bias = beta - r_mean * scale
    return w, scale, bias


def init_inception(key, inp, c1, c2, c3, c4, c5, c6):
    ks = jax.random.split(key, 6)
    return {
        "b1":  init_basic_conv(ks[0], inp, c1, 1),
        "b2a": init_basic_conv(ks[1], inp, c2, 1),
        "b2b": init_basic_conv(ks[2], c2, c3, 3),
        "b3a": init_basic_conv(ks[3], inp, c4, 1),
        "b3b": init_basic_conv(ks[4], c4, c5, 3),
        "b4":  init_basic_conv(ks[5], inp, c6, 1),
    }


def pack_inception_params(p):
    """Fold the six BasicConv2d stages into the fused kernel's weight layout."""
    w1, s1, b1 = p["b1"]
    w2a, s2a, b2a = p["b2a"]
    w2b, s2b, b2b = p["b2b"]
    w3a, s3a, b3a = p["b3a"]
    w3b, s3b, b3b = p["b3b"]
    w4, s4, b4 = p["b4"]
    cin = w1.shape[2]
    c1, c2, c3 = w1.shape[-1], w2a.shape[-1], w2b.shape[-1]
    c4, c5, c6 = w3a.shape[-1], w3b.shape[-1], w4.shape[-1]

    def t1x1(w):   # HWIO (1,1,cin,cout) -> (cout, cin)
        return jnp.transpose(w[0, 0], (1, 0))

    def col(v):    # (cout,) -> (cout, 1): lane-broadcast inside the kernel
        return v[:, None].astype(jnp.float32)

    # Stage 1: branch1 / branch2-1x1 / branch3-1x1 share the input.
    wA = jnp.concatenate([t1x1(w1), t1x1(w2a), t1x1(w3a)], axis=0)
    sA = jnp.concatenate([s1, s2a, s3a])
    bA = jnp.concatenate([b1, b2a, b3a])

    # Stage 2: branch2-3x3 + branch3-3x3 + branch4-1x1(on pooled x), one
    # block-structured weight.  K rows: 9 blocks of [c2|c4] ((kh,kw)-major),
    # then cin rows for the pooled input.  Output rows: [c3 | c5 | c6].
    K = 9 * (c2 + c4) + cin
    cB = c3 + c5 + c6
    wB = jnp.zeros((cB, K), jnp.float32)
    for kh in range(3):
        for kw in range(3):
            base = (3 * kh + kw) * (c2 + c4)
            wB = wB.at[:c3, base:base + c2].set(
                jnp.transpose(w2b[kh, kw], (1, 0)))
            wB = wB.at[c3:c3 + c5, base + c2:base + c2 + c4].set(
                jnp.transpose(w3b[kh, kw], (1, 0)))
    wB = wB.at[c3 + c5:, 9 * (c2 + c4):].set(t1x1(w4))
    sB = jnp.concatenate([s2b, s3b, s4])
    bB = jnp.concatenate([b2b, b3b, b4])

    packed = {
        "wA": wA.astype(jnp.bfloat16), "sA": col(sA), "bA": col(bA),
        "wB": wB.astype(jnp.bfloat16), "sB": col(sB), "bB": col(bB),
    }
    return packed, (c1, c2, c3, c4, c5, c6)


# ----------------------------- pure-JAX reference ----------------------------

def _bf16(a):
    # model the kernel's bf16 MXU operands (accumulation stays f32)
    return a.astype(jnp.bfloat16).astype(jnp.float32)


def _ref_conv_bn_relu(x, w, scale, bias, padding):
    y = jax.lax.conv_general_dilated(
        _bf16(x), _bf16(w), window_strides=(1, 1), padding=padding,
        dimension_numbers=("NCHW", "HWIO", "NCHW"),
        preferred_element_type=jnp.float32)
    y = y * scale[None, :, None, None] + bias[None, :, None, None]
    return jnp.maximum(y, 0.0)


def _ref_forward(x, p):
    b1 = _ref_conv_bn_relu(x, *p["b1"], "VALID")
    b2 = _ref_conv_bn_relu(
        _ref_conv_bn_relu(x, *p["b2a"], "VALID"), *p["b2b"], ((1, 1), (1, 1)))
    b3 = _ref_conv_bn_relu(
        _ref_conv_bn_relu(x, *p["b3a"], "VALID"), *p["b3b"], ((1, 1), (1, 1)))
    pooled = jax.lax.reduce_window(
        x, -jnp.inf, jax.lax.max, (1, 1, 3, 3), (1, 1, 1, 1),
        padding=((0, 0), (0, 0), (1, 1), (1, 1)))
    b4 = _ref_conv_bn_relu(pooled, *p["b4"], "VALID")
    return jnp.concatenate([b1, b2, b3, b4], axis=1)


# ----------------------------------- main -------------------------------------

if __name__ == "__main__":
    key = jax.random.PRNGKey(0)
    k_x, k_p = jax.random.split(key)

    # Small shapes; N=4 exercises the batch-folded (multi-image lane) path.
    N, INP, H, W = 4, 4, 16, 16
    C1, C2, C3, C4, C5, C6 = 8, 4, 8, 4, 8, 8

    x = jax.random.normal(k_x, (N, INP, H, W), jnp.float32)   # NCHW, like PyTorch
    raw_params = init_inception(k_p, INP, C1, C2, C3, C4, C5, C6)
    packed, dims = pack_inception_params(raw_params)

    # v7x-friendly split: 2 parallel grid steps, N/2 images folded per step.
    nb = N // 2 if (N % 2 == 0 and N >= 2) else N
    Lf = nb * H * W
    shifts = tuple(sorted({(-(dh * W + dw)) % Lf
                           for dh, dw in _TAPS if (dh, dw) != (0, 0)}))
    use_roll = _pltpu_roll_is_usable(Lf, shifts)

    out = inception_forward(x, packed, dims=dims, nb=nb, use_roll=use_roll)
    out = jax.block_until_ready(out)
    assert out.shape == (N, C1 + C3 + C5 + C6, H, W), out.shape

    ref = _ref_forward(x, raw_params)
    err = float(jnp.max(jnp.abs(out - ref)))
    assert err < 2e-3, err

    print("KERNEL_OK")
</pallas_src>

<mosaic_0001>
module attributes {stable_mosaic.version = 11 : i64} {
  func.func @kern(%arg0: memref<8x512xf32, #tpu.memory_space<vmem>>, %arg1: memref<8x8x512xf32, #tpu.memory_space<vmem>>) attributes {dimension_semantics = [], scalar_prefetch = 0 : i64, scratch_operands = 0 : i64, tpu.core_type = #tpu.core_type<tc>} {
    %c0 = arith.constant 0 : index
    %c0_0 = arith.constant 0 : index
    %0 = vector.load %arg0[%c0, %c0_0] : memref<8x512xf32, #tpu.memory_space<vmem>>, vector<8x512xf32>
    %c1_i32 = arith.constant 1 : i32
    %1 = tpu.dynamic_rotate %0 by %c1_i32 dim 1 : vector<8x512xf32>, i32 -> vector<8x512xf32>
    %c0_1 = arith.constant 0 : index
    %c0_2 = arith.constant 0 : index
    %c0_3 = arith.constant 0 : index
    %2 = vector.load %arg1[%c0_1, %c0_2, %c0_3] : memref<8x8x512xf32, #tpu.memory_space<vmem>>, vector<1x8x512xf32>
    %3 = vector.shape_cast %2 : vector<1x8x512xf32> to vector<8x512xf32>
    %4 = vector.shape_cast %1 : vector<8x512xf32> to vector<1x8x512xf32>
    tpu.vector_store %arg1[%c0_1, %c0_2, %c0_3], %4 {strides = array<i32>} : memref<8x8x512xf32, #tpu.memory_space<vmem>>, vector<1x8x512xf32>,
    %c15_i32 = arith.constant 15 : i32
    %5 = tpu.dynamic_rotate %0 by %c15_i32 dim 1 : vector<8x512xf32>, i32 -> vector<8x512xf32>
    %c1 = arith.constant 1 : index
    %c0_4 = arith.constant 0 : index
    %c0_5 = arith.constant 0 : index
    %6 = vector.load %arg1[%c1, %c0_4, %c0_5] : memref<8x8x512xf32, #tpu.memory_space<vmem>>, vector<1x8x512xf32>
    %7 = vector.shape_cast %6 : vector<1x8x512xf32> to vector<8x512xf32>
    %8 = vector.shape_cast %5 : vector<8x512xf32> to vector<1x8x512xf32>
    tpu.vector_store %arg1[%c1, %c0_4, %c0_5], %8 {strides = array<i32>} : memref<8x8x512xf32, #tpu.memory_space<vmem>>, vector<1x8x512xf32>,
    %c16_i32 = arith.constant 16 : i32
    %9 = tpu.dynamic_rotate %0 by %c16_i32 dim 1 : vector<8x512xf32>, i32 -> vector<8x512xf32>
    %c2 = arith.constant 2 : index
    %c0_6 = arith.constant 0 : index
    %c0_7 = arith.constant 0 : index
    %10 = vector.load %arg1[%c2, %c0_6, %c0_7] : memref<8x8x512xf32, #tpu.memory_space<vmem>>, vector<1x8x512xf32>
    %11 = vector.shape_cast %10 : vector<1x8x512xf32> to vector<8x512xf32>
    %12 = vector.shape_cast %9 : vector<8x512xf32> to vector<1x8x512xf32>
    tpu.vector_store %arg1[%c2, %c0_6, %c0_7], %12 {strides = array<i32>} : memref<8x8x512xf32, #tpu.memory_space<vmem>>, vector<1x8x512xf32>,
    %c17_i32 = arith.constant 17 : i32
    %13 = tpu.dynamic_rotate %0 by %c17_i32 dim 1 : vector<8x512xf32>, i32 -> vector<8x512xf32>
    %c3 = arith.constant 3 : index
    %c0_8 = arith.constant 0 : index
    %c0_9 = arith.constant 0 : index
    %14 = vector.load %arg1[%c3, %c0_8, %c0_9] : memref<8x8x512xf32, #tpu.memory_space<vmem>>, vector<1x8x512xf32>
    %15 = vector.shape_cast %14 : vector<1x8x512xf32> to vector<8x512xf32>
    %16 = vector.shape_cast %13 : vector<8x512xf32> to vector<1x8x512xf32>
    tpu.vector_store %arg1[%c3, %c0_8, %c0_9], %16 {strides = array<i32>} : memref<8x8x512xf32, #tpu.memory_space<vmem>>, vector<1x8x512xf32>,
    %c495_i32 = arith.constant 495 : i32
    %17 = tpu.dynamic_rotate %0 by %c495_i32 dim 1 : vector<8x512xf32>, i32 -> vector<8x512xf32>
    %c4 = arith.constant 4 : index
    %c0_10 = arith.constant 0 : index
    %c0_11 = arith.constant 0 : index
    %18 = vector.load %arg1[%c4, %c0_10, %c0_11] : memref<8x8x512xf32, #tpu.memory_space<vmem>>, vector<1x8x512xf32>
    %19 = vector.shape_cast %18 : vector<1x8x512xf32> to vector<8x512xf32>
    %20 = vector.shape_cast %17 : vector<8x512xf32> to vector<1x8x512xf32>
    tpu.vector_store %arg1[%c4, %c0_10, %c0_11], %20 {strides = array<i32>} : memref<8x8x512xf32, #tpu.memory_space<vmem>>, vector<1x8x512xf32>,
    %c496_i32 = arith.constant 496 : i32
    %21 = tpu.dynamic_rotate %0 by %c496_i32 dim 1 : vector<8x512xf32>, i32 -> vector<8x512xf32>
    %c5 = arith.constant 5 : index
    %c0_12 = arith.constant 0 : index
    %c0_13 = arith.constant 0 : index
    %22 = vector.load %arg1[%c5, %c0_12, %c0_13] : memref<8x8x512xf32, #tpu.memory_space<vmem>>, vector<1x8x512xf32>
    %23 = vector.shape_cast %22 : vector<1x8x512xf32> to vector<8x512xf32>
    %24 = vector.shape_cast %21 : vector<8x512xf32> to vector<1x8x512xf32>
    tpu.vector_store %arg1[%c5, %c0_12, %c0_13], %24 {strides = array<i32>} : memref<8x8x512xf32, #tpu.memory_space<vmem>>, vector<1x8x512xf32>,
    %c497_i32 = arith.constant 497 : i32
    %25 = tpu.dynamic_rotate %0 by %c497_i32 dim 1 : vector<8x512xf32>, i32 -> vector<8x512xf32>
    %c6 = arith.constant 6 : index
    %c0_14 = arith.constant 0 : index
    %c0_15 = arith.constant 0 : index
    %26 = vector.load %arg1[%c6, %c0_14, %c0_15] : memref<8x8x512xf32, #tpu.memory_space<vmem>>, vector<1x8x512xf32>
    %27 = vector.shape_cast %26 : vector<1x8x512xf32> to vector<8x512xf32>
    %28 = vector.shape_cast %25 : vector<8x512xf32> to vector<1x8x512xf32>
    tpu.vector_store %arg1[%c6, %c0_14, %c0_15], %28 {strides = array<i32>} : memref<8x8x512xf32, #tpu.memory_space<vmem>>, vector<1x8x512xf32>,
    %c511_i32 = arith.constant 511 : i32
    %29 = tpu.dynamic_rotate %0 by %c511_i32 dim 1 : vector<8x512xf32>, i32 -> vector<8x512xf32>
    %c7 = arith.constant 7 : index
    %c0_16 = arith.constant 0 : index
    %c0_17 = arith.constant 0 : index
    %30 = vector.load %arg1[%c7, %c0_16, %c0_17] : memref<8x8x512xf32, #tpu.memory_space<vmem>>, vector<1x8x512xf32>
    %31 = vector.shape_cast %30 : vector<1x8x512xf32> to vector<8x512xf32>
    %32 = vector.shape_cast %29 : vector<8x512xf32> to vector<1x8x512xf32>
    tpu.vector_store %arg1[%c7, %c0_16, %c0_17], %32 {strides = array<i32>} : memref<8x8x512xf32, #tpu.memory_space<vmem>>, vector<1x8x512xf32>,
    return
  }
}

module attributes {stable_mosaic.version = 11 : i64} {
  func.func @_inception_kernel(%arg0: i32, %arg1: memref<1x4x512xf32, #tpu.memory_space<vmem>>, %arg2: memref<9x512xf32, #tpu.memory_space<vmem>>, %arg3: memref<16x4xbf16, #tpu.memory_space<vmem>>, %arg4: memref<16x1xf32, #tpu.memory_space<vmem>>, %arg5: memref<16x1xf32, #tpu.memory_space<vmem>>, %arg6: memref<24x76xbf16, #tpu.memory_space<vmem>>, %arg7: memref<24x1xf32, #tpu.memory_space<vmem>>, %arg8: memref<24x1xf32, #tpu.memory_space<vmem>>, %arg9: memref<1x32x512xf32, #tpu.memory_space<vmem>>) attributes {dimension_semantics = [#tpu.dimension_semantics<parallel>], iteration_bounds = array<i64: 2>, scalar_prefetch = 0 : i64, scratch_operands = 0 : i64, tpu.core_type = #tpu.core_type<tc>, window_params = [{transform_indices = @transform_0, window_bounds = array<i64: 1, 4, 512>}, {pipeline_mode = #tpu.pipeline_mode<synchronous>, transform_indices = @transform_1, window_bounds = array<i64: 9, 512>}, {pipeline_mode = #tpu.pipeline_mode<synchronous>, transform_indices = @transform_2, window_bounds = array<i64: 16, 4>}, {pipeline_mode = #tpu.pipeline_mode<synchronous>, transform_indices = @transform_3, window_bounds = array<i64: 16, 1>}, {pipeline_mode = #tpu.pipeline_mode<synchronous>, transform_indices = @transform_4, window_bounds = array<i64: 16, 1>}, {pipeline_mode = #tpu.pipeline_mode<synchronous>, transform_indices = @transform_5, window_bounds = array<i64: 24, 76>}, {pipeline_mode = #tpu.pipeline_mode<synchronous>, transform_indices = @transform_6, window_bounds = array<i64: 24, 1>}, {pipeline_mode = #tpu.pipeline_mode<synchronous>, transform_indices = @transform_7, window_bounds = array<i64: 24, 1>}, {transform_indices = @transform_8, window_bounds = array<i64: 1, 32, 512>}]} {
    %c0 = arith.constant 0 : index
    %c0_0 = arith.constant 0 : index
    %c0_1 = arith.constant 0 : index
    %0 = vector.load %arg1[%c0, %c0_0, %c0_1] : memref<1x4x512xf32, #tpu.memory_space<vmem>>, vector<1x4x512xf32>
    %1 = vector.shape_cast %0 : vector<1x4x512xf32> to vector<4x512xf32>
    %c0_2 = arith.constant 0 : index
    %c0_3 = arith.constant 0 : index
    %2 = vector.load %arg3[%c0_2, %c0_3] : memref<16x4xbf16, #tpu.memory_space<vmem>>, vector<16x4xbf16>
    %3 = arith.truncf %1 : vector<4x512xf32> to vector<4x512xbf16>
    %cst = arith.constant dense<0.000000e+00> : vector<16x512xf32>
    %4 = tpu.matmul %2, %3, %cst {dimension_numbers = #tpu.dot_dimension_numbers<[1], [0], [0], [1], [0, 0, 1, 1], [], []>} : vector<16x4xbf16>, vector<4x512xbf16>, vector<16x512xf32> -> vector<16x512xf32>
    %c0_4 = arith.constant 0 : index
    %c0_5 = arith.constant 0 : index
    %5 = vector.load %arg4[%c0_4, %c0_5] : memref<16x1xf32, #tpu.memory_space<vmem>>, vector<16x1xf32>
    %6 = vector.broadcast %5 : vector<16x1xf32> to vector<16x512xf32>
    %7 = arith.mulf %4, %6 : vector<16x512xf32>
    %c0_6 = arith.constant 0 : index
    %c0_7 = arith.constant 0 : index
    %8 = vector.load %arg5[%c0_6, %c0_7] : memref<16x1xf32, #tpu.memory_space<vmem>>, vector<16x1xf32>
    %9 = vector.broadcast %8 : vector<16x1xf32> to vector<16x512xf32>
    %10 = arith.addf %7, %9 : vector<16x512xf32>
    %cst_8 = arith.constant 0.000000e+00 : f32
    %11 = vector.broadcast %cst_8 : f32 to vector<16x512xf32>
    %12 = arith.maximumf %10, %11 : vector<16x512xf32>
    %13 = vector.extract_strided_slice %12 {offsets = [0, 0], sizes = [8, 512], strides = [1, 1]} : vector<16x512xf32> to vector<8x512xf32>
    %c0_9 = arith.constant 0 : index
    %c0_10 = arith.constant 0 : index
    %c0_11 = arith.constant 0 : index
    %14 = vector.load %arg9[%c0_9, %c0_10, %c0_11] : memref<1x32x512xf32, #tpu.memory_space<vmem>>, vector<1x8x512xf32>
    %15 = vector.shape_cast %14 : vector<1x8x512xf32> to vector<8x512xf32>
    %16 = vector.shape_cast %13 : vector<8x512xf32> to vector<1x8x512xf32>
    tpu.vector_store %arg9[%c0_9, %c0_10, %c0_11], %16 {strides = array<i32>} : memref<1x32x512xf32, #tpu.memory_space<vmem>>, vector<1x8x512xf32>,
    %17 = vector.extract_strided_slice %12 {offsets = [8, 0], sizes = [8, 512], strides = [1, 1]} : vector<16x512xf32> to vector<8x512xf32>
    %c0_12 = arith.constant 0 : index
    %c0_13 = arith.constant 0 : index
    %18 = vector.load %arg2[%c0_12, %c0_13] : memref<9x512xf32, #tpu.memory_space<vmem>>, vector<1x512xf32>
    %19 = vector.extract_strided_slice %17 {offsets = [0, 495], sizes = [8, 17], strides = [1, 1]} : vector<8x512xf32> to vector<8x17xf32>
    %20 = vector.extract_strided_slice %17 {offsets = [0, 0], sizes = [8, 495], strides = [1, 1]} : vector<8x512xf32> to vector<8x495xf32>
    %21 = tpu.concatenate %19, %20 in 1 : vector<8x17xf32>, vector<8x495xf32> -> vector<8x512xf32>
    %22 = vector.broadcast %18 : vector<1x512xf32> to vector<8x512xf32>
    %23 = arith.mulf %21, %22 : vector<8x512xf32>
    %cst_14 = arith.constant 5.000000e-01 : f32
    %24 = vector.broadcast %cst_14 : f32 to vector<1x512xf32>
    %25 = arith.cmpf ogt, %18, %24 : vector<1x512xf32>
    %26 = vector.extract_strided_slice %1 {offsets = [0, 495], sizes = [4, 17], strides = [1, 1]} : vector<4x512xf32> to vector<4x17xf32>
    %27 = vector.extract_strided_slice %1 {offsets = [0, 0], sizes = [4, 495], strides = [1, 1]} : vector<4x512xf32> to vector<4x495xf32>
    %28 = tpu.concatenate %26, %27 in 1 : vector<4x17xf32>, vector<4x495xf32> -> vector<4x512xf32>
    %29 = vector.shape_cast %25 : vector<1x512xi1> to vector<1x512xi1>
    %30 = vector.broadcast %29 : vector<1x512xi1> to vector<4x512xi1>
    %31 = arith.select %30, %28, %1 : vector<4x512xi1>, vector<4x512xf32>
    %32 = arith.maximumf %1, %31 : vector<4x512xf32>
    %c1 = arith.constant 1 : index
    %c0_15 = arith.constant 0 : index
    %33 = vector.load %arg2[%c1, %c0_15] : memref<9x512xf32, #tpu.memory_space<vmem>>, vector<1x512xf32>
    %34 = vector.extract_strided_slice %17 {offsets = [0, 496], sizes = [8, 16], strides = [1, 1]} : vector<8x512xf32> to vector<8x16xf32>
    %35 = vector.extract_strided_slice %17 {offsets = [0, 0], sizes = [8, 496], strides = [1, 1]} : vector<8x512xf32> to vector<8x496xf32>
    %36 = tpu.concatenate %34, %35 in 1 : vector<8x16xf32>, vector<8x496xf32> -> vector<8x512xf32>
    %37 = vector.broadcast %33 : vector<1x512xf32> to vector<8x512xf32>
    %38 = arith.mulf %36, %37 : vector<8x512xf32>
    %cst_16 = arith.constant 5.000000e-01 : f32
    %39 = vector.broadcast %cst_16 : f32 to vector<1x512xf32>
    %40 = arith.cmpf ogt, %33, %39 : vector<1x512xf32>
    %41 = vector.extract_strided_slice %1 {offsets = [0, 496], sizes = [4, 16], strides = [1, 1]} : vector<4x512xf32> to vector<4x16xf32>
    %42 = vector.extract_strided_slice %1 {offsets = [0, 0], sizes = [4, 496], strides = [1, 1]} : vector<4x512xf32> to vector<4x496xf32>
    %43 = tpu.concatenate %41, %42 in 1 : vector<4x16xf32>, vector<4x496xf32> -> vector<4x512xf32>
    %44 = vector.shape_cast %40 : vector<1x512xi1> to vector<1x512xi1>
    %45 = vector.broadcast %44 : vector<1x512xi1> to vector<4x512xi1>
    %46 = arith.select %45, %43, %1 : vector<4x512xi1>, vector<4x512xf32>
    %47 = arith.maximumf %32, %46 : vector<4x512xf32>
    %c2 = arith.constant 2 : index
    %c0_17 = arith.constant 0 : index
    %48 = vector.load %arg2[%c2, %c0_17] : memref<9x512xf32, #tpu.memory_space<vmem>>, vector<1x512xf32>
    %49 = vector.extract_strided_slice %17 {offsets = [0, 497], sizes = [8, 15], strides = [1, 1]} : vector<8x512xf32> to vector<8x15xf32>
    %50 = vector.extract_strided_slice %17 {offsets = [0, 0], sizes = [8, 497], strides = [1, 1]} : vector<8x512xf32> to vector<8x497xf32>
    %51 = tpu.concatenate %49, %50 in 1 : vector<8x15xf32>, vector<8x497xf32> -> vector<8x512xf32>
    %52 = vector.broadcast %48 : vector<1x512xf32> to vector<8x512xf32>
    %53 = arith.mulf %51, %52 : vector<8x512xf32>
    %cst_18 = arith.constant 5.000000e-01 : f32
    %54 = vector.broadcast %cst_18 : f32 to vector<1x512xf32>
    %55 = arith.cmpf ogt, %48, %54 : vector<1x512xf32>
    %56 = vector.extract_strided_slice %1 {offsets = [0, 497], sizes = [4, 15], strides = [1, 1]} : vector<4x512xf32> to vector<4x15xf32>
    %57 = vector.extract_strided_slice %1 {offsets = [0, 0], sizes = [4, 497], strides = [1, 1]} : vector<4x512xf32> to vector<4x497xf32>
    %58 = tpu.concatenate %56, %57 in 1 : vector<4x15xf32>, vector<4x497xf32> -> vector<4x512xf32>
    %59 = vector.shape_cast %55 : vector<1x512xi1> to vector<1x512xi1>
    %60 = vector.broadcast %59 : vector<1x512xi1> to vector<4x512xi1>
    %61 = arith.select %60, %58, %1 : vector<4x512xi1>, vector<4x512xf32>
    %62 = arith.maximumf %47, %61 : vector<4x512xf32>
    %c3 = arith.constant 3 : index
    %c0_19 = arith.constant 0 : index
    %63 = vector.load %arg2[%c3, %c0_19] : memref<9x512xf32, #tpu.memory_space<vmem>>, vector<1x512xf32>
    %64 = vector.extract_strided_slice %17 {offsets = [0, 511], sizes = [8, 1], strides = [1, 1]} : vector<8x512xf32> to vector<8x1xf32>
    %65 = vector.extract_strided_slice %17 {offsets = [0, 0], sizes = [8, 511], strides = [1, 1]} : vector<8x512xf32> to vector<8x511xf32>
    %66 = tpu.concatenate %64, %65 in 1 : vector<8x1xf32>, vector<8x511xf32> -> vector<8x512xf32>
    %67 = vector.broadcast %63 : vector<1x512xf32> to vector<8x512xf32>
    %68 = arith.mulf %66, %67 : vector<8x512xf32>
    %cst_20 = arith.constant 5.000000e-01 : f32
    %69 = vector.broadcast %cst_20 : f32 to vector<1x512xf32>
    %70 = arith.cmpf ogt, %63, %69 : vector<1x512xf32>
    %71 = vector.extract_strided_slice %1 {offsets = [0, 511], sizes = [4, 1], strides = [1, 1]} : vector<4x512xf32> to vector<4x1xf32>
    %72 = vector.extract_strided_slice %1 {offsets = [0, 0], sizes = [4, 511], strides = [1, 1]} : vector<4x512xf32> to vector<4x511xf32>
    %73 = tpu.concatenate %71, %72 in 1 : vector<4x1xf32>, vector<4x511xf32> -> vector<4x512xf32>
    %74 = vector.shape_cast %70 : vector<1x512xi1> to vector<1x512xi1>
    %75 = vector.broadcast %74 : vector<1x512xi1> to vector<4x512xi1>
    %76 = arith.select %75, %73, %1 : vector<4x512xi1>, vector<4x512xf32>
    %77 = arith.maximumf %62, %76 : vector<4x512xf32>
    %c5 = arith.constant 5 : index
    %c0_21 = arith.constant 0 : index
    %78 = vector.load %arg2[%c5, %c0_21] : memref<9x512xf32, #tpu.memory_space<vmem>>, vector<1x512xf32>
    %79 = vector.extract_strided_slice %17 {offsets = [0, 1], sizes = [8, 511], strides = [1, 1]} : vector<8x512xf32> to vector<8x511xf32>
    %80 = vector.extract_strided_slice %17 {offsets = [0, 0], sizes = [8, 1], strides = [1, 1]} : vector<8x512xf32> to vector<8x1xf32>
    %81 = tpu.concatenate %79, %80 in 1 : vector<8x511xf32>, vector<8x1xf32> -> vector<8x512xf32>
    %82 = vector.broadcast %78 : vector<1x512xf32> to vector<8x512xf32>
    %83 = arith.mulf %81, %82 : vector<8x512xf32>
    %cst_22 = arith.constant 5.000000e-01 : f32
    %84 = vector.broadcast %cst_22 : f32 to vector<1x512xf32>
    %85 = arith.cmpf ogt, %78, %84 : vector<1x512xf32>
    %86 = vector.extract_strided_slice %1 {offsets = [0, 1], sizes = [4, 511], strides = [1, 1]} : vector<4x512xf32> to vector<4x511xf32>
    %87 = vector.extract_strided_slice %1 {offsets = [0, 0], sizes = [4, 1], strides = [1, 1]} : vector<4x512xf32> to vector<4x1xf32>
    %88 = tpu.concatenate %86, %87 in 1 : vector<4x511xf32>, vector<4x1xf32> -> vector<4x512xf32>
    %89 = vector.shape_cast %85 : vector<1x512xi1> to vector<1x512xi1>
    %90 = vector.broadcast %89 : vector<1x512xi1> to vector<4x512xi1>
    %91 = arith.select %90, %88, %1 : vector<4x512xi1>, vector<4x512xf32>
    %92 = arith.maximumf %77, %91 : vector<4x512xf32>
    %c6 = arith.constant 6 : index
    %c0_23 = arith.constant 0 : index
    %93 = vector.load %arg2[%c6, %c0_23] : memref<9x512xf32, #tpu.memory_space<vmem>>, vector<1x512xf32>
    %94 = vector.extract_strided_slice %17 {offsets = [0, 15], sizes = [8, 497], strides = [1, 1]} : vector<8x512xf32> to vector<8x497xf32>
    %95 = vector.extract_strided_slice %17 {offsets = [0, 0], sizes = [8, 15], strides = [1, 1]} : vector<8x512xf32> to vector<8x15xf32>
    %96 = tpu.concatenate %94, %95 in 1 : vector<8x497xf32>, vector<8x15xf32> -> vector<8x512xf32>
    %97 = vector.broadcast %93 : vector<1x512xf32> to vector<8x512xf32>
    %98 = arith.mulf %96, %97 : vector<8x512xf32>
    %cst_24 = arith.constant 5.000000e-01 : f32
    %99 = vector.broadcast %cst_24 : f32 to vector<1x512xf32>
    %100 = arith.cmpf ogt, %93, %99 : vector<1x512xf32>
    %101 = vector.extract_strided_slice %1 {offsets = [0, 15], sizes = [4, 497], strides = [1, 1]} : vector<4x512xf32> to vector<4x497xf32>
    %102 = vector.extract_strided_slice %1 {offsets = [0, 0], sizes = [4, 15], strides = [1, 1]} : vector<4x512xf32> to vector<4x15xf32>
    %103 = tpu.concatenate %101, %102 in 1 : vector<4x497xf32>, vector<4x15xf32> -> vector<4x512xf32>
    %104 = vector.shape_cast %100 : vector<1x512xi1> to vector<1x512xi1>
    %105 = vector.broadcast %104 : vector<1x512xi1> to vector<4x512xi1>
    %106 = arith.select %105, %103, %1 : vector<4x512xi1>, vector<4x512xf32>
    %107 = arith.maximumf %92, %106 : vector<4x512xf32>
    %c7 = arith.constant 7 : index
    %c0_25 = arith.constant 0 : index
    %108 = vector.load %arg2[%c7, %c0_25] : memref<9x512xf32, #tpu.memory_space<vmem>>, vector<1x512xf32>
    %109 = vector.extract_strided_slice %17 {offsets = [0, 16], sizes = [8, 496], strides = [1, 1]} : vector<8x512xf32> to vector<8x496xf32>
    %110 = vector.extract_strided_slice %17 {offsets = [0, 0], sizes = [8, 16], strides = [1, 1]} : vector<8x512xf32> to vector<8x16xf32>
    %111 = tpu.concatenate %109, %110 in 1 : vector<8x496xf32>, vector<8x16xf32> -> vector<8x512xf32>
    %112 = vector.broadcast %108 : vector<1x512xf32> to vector<8x512xf32>
    %113 = arith.mulf %111, %112 : vector<8x512xf32>
    %cst_26 = arith.constant 5.000000e-01 : f32
    %114 = vector.broadcast %cst_26 : f32 to vector<1x512xf32>
    %115 = arith.cmpf ogt, %108, %114 : vector<1x512xf32>
    %116 = vector.extract_strided_slice %1 {offsets = [0, 16], sizes = [4, 496], strides = [1, 1]} : vector<4x512xf32> to vector<4x496xf32>
    %117 = vector.extract_strided_slice %1 {offsets = [0, 0], sizes = [4, 16], strides = [1, 1]} : vector<4x512xf32> to vector<4x16xf32>
    %118 = tpu.concatenate %116, %117 in 1 : vector<4x496xf32>, vector<4x16xf32> -> vector<4x512xf32>
    %119 = vector.shape_cast %115 : vector<1x512xi1> to vector<1x512xi1>
    %120 = vector.broadcast %119 : vector<1x512xi1> to vector<4x512xi1>
    %121 = arith.select %120, %118, %1 : vector<4x512xi1>, vector<4x512xf32>
    %122 = arith.maximumf %107, %121 : vector<4x512xf32>
    %c8 = arith.constant 8 : index
    %c0_27 = arith.constant 0 : index
    %123 = vector.load %arg2[%c8, %c0_27] : memref<9x512xf32, #tpu.memory_space<vmem>>, vector<1x512xf32>
    %124 = vector.extract_strided_slice %17 {offsets = [0, 17], sizes = [8, 495], strides = [1, 1]} : vector<8x512xf32> to vector<8x495xf32>
    %125 = vector.extract_strided_slice %17 {offsets = [0, 0], sizes = [8, 17], strides = [1, 1]} : vector<8x512xf32> to vector<8x17xf32>
    %126 = tpu.concatenate %124, %125 in 1 : vector<8x495xf32>, vector<8x17xf32> -> vector<8x512xf32>
    %127 = vector.broadcast %123 : vector<1x512xf32> to vector<8x512xf32>
    %128 = arith.mulf %126, %127 : vector<8x512xf32>
    %cst_28 = arith.constant 5.000000e-01 : f32
    %129 = vector.broadcast %cst_28 : f32 to vector<1x512xf32>
    %130 = arith.cmpf ogt, %123, %129 : vector<1x512xf32>
    %131 = vector.extract_strided_slice %1 {offsets = [0, 17], sizes = [4, 495], strides = [1, 1]} : vector<4x512xf32> to vector<4x495xf32>
    %132 = vector.extract_strided_slice %1 {offsets = [0, 0], sizes = [4, 17], strides = [1, 1]} : vector<4x512xf32> to vector<4x17xf32>
    %133 = tpu.concatenate %131, %132 in 1 : vector<4x495xf32>, vector<4x17xf32> -> vector<4x512xf32>
    %134 = vector.shape_cast %130 : vector<1x512xi1> to vector<1x512xi1>
    %135 = vector.broadcast %134 : vector<1x512xi1> to vector<4x512xi1>
    %136 = arith.select %135, %133, %1 : vector<4x512xi1>, vector<4x512xf32>
    %137 = arith.maximumf %122, %136 : vector<4x512xf32>
    %138 = tpu.concatenate %23, %38, %53, %68, %17, %83, %98, %113, %128, %137 in 0 : vector<8x512xf32>, vector<8x512xf32>, vector<8x512xf32>, vector<8x512xf32>, vector<8x512xf32>, vector<8x512xf32>, vector<8x512xf32>, vector<8x512xf32>, vector<8x512xf32>, vector<4x512xf32> -> vector<76x512xf32>
    %c0_29 = arith.constant 0 : index
    %c0_30 = arith.constant 0 : index
    %139 = vector.load %arg6[%c0_29, %c0_30] : memref<24x76xbf16, #tpu.memory_space<vmem>>, vector<24x76xbf16>
    %140 = arith.truncf %138 : vector<76x512xf32> to vector<76x512xbf16>
    %cst_31 = arith.constant dense<0.000000e+00> : vector<24x512xf32>
    %141 = tpu.matmul %139, %140, %cst_31 {dimension_numbers = #tpu.dot_dimension_numbers<[1], [0], [0], [1], [0, 0, 1, 1], [], []>} : vector<24x76xbf16>, vector<76x512xbf16>, vector<24x512xf32> -> vector<24x512xf32>
    %c0_32 = arith.constant 0 : index
    %c0_33 = arith.constant 0 : index
    %142 = vector.load %arg7[%c0_32, %c0_33] : memref<24x1xf32, #tpu.memory_space<vmem>>, vector<24x1xf32>
    %143 = vector.broadcast %142 : vector<24x1xf32> to vector<24x512xf32>
    %144 = arith.mulf %141, %143 : vector<24x512xf32>
    %c0_34 = arith.constant 0 : index
    %c0_35 = arith.constant 0 : index
    %145 = vector.load %arg8[%c0_34, %c0_35] : memref<24x1xf32, #tpu.memory_space<vmem>>, vector<24x1xf32>
    %146 = vector.broadcast %145 : vector<24x1xf32> to vector<24x512xf32>
    %147 = arith.addf %144, %146 : vector<24x512xf32>
    %cst_36 = arith.constant 0.000000e+00 : f32
    %148 = vector.broadcast %cst_36 : f32 to vector<24x512xf32>
    %149 = arith.maximumf %147, %148 : vector<24x512xf32>
    %c0_37 = arith.constant 0 : index
    %c8_38 = arith.constant 8 : index
    %c0_39 = arith.constant 0 : index
    %150 = vector.load %arg9[%c0_37, %c8_38, %c0_39] : memref<1x32x512xf32, #tpu.memory_space<vmem>>, vector<1x24x512xf32>
    %151 = vector.shape_cast %150 : vector<1x24x512xf32> to vector<24x512xf32>
    %152 = vector.shape_cast %149 : vector<24x512xf32> to vector<1x24x512xf32>
    tpu.vector_store %arg9[%c0_37, %c8_38, %c0_39], %152 {strides = array<i32>} : memref<1x32x512xf32, #tpu.memory_space<vmem>>, vector<1x24x512xf32>,
    return
  }
  func.func @transform_0(%arg0: i32) -> (i32, i32, i32) {
    %c0_i32 = arith.constant 0 : i32
    %c0_i32_0 = arith.constant 0 : i32
    %c0_i32_1 = arith.constant 0 : i32
    return %arg0, %c0_i32, %c0_i32_0 : i32, i32, i32
  }
  func.func @transform_1(%arg0: i32) -> (i32, i32) {
    %c0_i32 = arith.constant 0 : i32
    %c0_i32_0 = arith.constant 0 : i32
    %c0_i32_1 = arith.constant 0 : i32
    return %c0_i32, %c0_i32_0 : i32, i32
  }
  func.func @transform_2(%arg0: i32) -> (i32, i32) {
    %c0_i32 = arith.constant 0 : i32
    %c0_i32_0 = arith.constant 0 : i32
    %c0_i32_1 = arith.constant 0 : i32
    return %c0_i32, %c0_i32_0 : i32, i32
  }
  func.func @transform_3(%arg0: i32) -> (i32, i32) {
    %c0_i32 = arith.constant 0 : i32
    %c0_i32_0 = arith.constant 0 : i32
    %c0_i32_1 = arith.constant 0 : i32
    return %c0_i32, %c0_i32_0 : i32, i32
  }
  func.func @transform_4(%arg0: i32) -> (i32, i32) {
    %c0_i32 = arith.constant 0 : i32
    %c0_i32_0 = arith.constant 0 : i32
    %c0_i32_1 = arith.constant 0 : i32
    return %c0_i32, %c0_i32_0 : i32, i32
  }
  func.func @transform_5(%arg0: i32) -> (i32, i32) {
    %c0_i32 = arith.constant 0 : i32
    %c0_i32_0 = arith.constant 0 : i32
    %c0_i32_1 = arith.constant 0 : i32
    return %c0_i32, %c0_i32_0 : i32, i32
  }
  func.func @transform_6(%arg0: i32) -> (i32, i32) {
    %c0_i32 = arith.constant 0 : i32
    %c0_i32_0 = arith.constant 0 : i32
    %c0_i32_1 = arith.constant 0 : i32
    return %c0_i32, %c0_i32_0 : i32, i32
  }
  func.func @transform_7(%arg0: i32) -> (i32, i32) {
    %c0_i32 = arith.constant 0 : i32
    %c0_i32_0 = arith.constant 0 : i32
    %c0_i32_1 = arith.constant 0 : i32
    return %c0_i32, %c0_i32_0 : i32, i32
  }
  func.func @transform_8(%arg0: i32) -> (i32, i32, i32) {
    %c0_i32 = arith.constant 0 : i32
    %c0_i32_0 = arith.constant 0 : i32
    %c0_i32_1 = arith.constant 0 : i32
    return %arg0, %c0_i32, %c0_i32_0 : i32, i32, i32
  }
}

</mosaic_0001>

<llo_original>
// kernel: tpu_custom_call.1
$region0: #{tpu_custom_call.1}
  #allocation0 [shape = 'u32[]', space=smem, size = 0x4, offset = 0x4, fixed_abs, tag = 'smem constant byte address 0x4 - core index']
  #allocation1 [shape = 'u32[144,128]{1,0:T(1,128)}', space=vmem, size = 0x12000, scoped, tag = 'internal scratch']
  %s0 = inlined_call_operand.hbm [shape: f32[8,512], index: 0, kind: input, shape index: {}]
  %s1 = inlined_call_operand.hbm [shape: f32[8,8,512], index: 1, kind: output, shape index: {}]
  %s2 = sld [smem:[#allocation0]]
  $region18: #{tpu_custom_call.1} parent=0
    _
  %s4 = ssub.s32 1, %s2
  %s5 = scalar_select 0, %s4, %s2
  $region1: #{tpu_custom_call.1} parent=0
    #allocation2 [shape = 'u8[16384]{0}', space=vmem, size = 0x4000, scoped, tag = 'input window, operand 0, single buffered']
    #allocation3 [shape = 's32[1]{0}', space=sflag, size = 0x4, scoped, tag = 'scoped memory for tpu_custom_call.1']
    #allocation4 [shape = 's32[1]{0}', space=sflag, size = 0x4, scoped, tag = 'scoped memory for tpu_custom_call.1']
    #allocation5 [shape = 'u8[131072]{0}', space=vmem, size = 0x20000, scoped, tag = 'output window, operand 0, single buffered']
    %6 = vsyncpa [#allocation3], 0
    %7 = vsyncpa [#allocation4], 0
    // Predicated region
    $region2: #{tpu_custom_call.1} parent=1 // pred_check
      _
    $region3: #{tpu_custom_call.1} parent=1 // pred_check_branch
      %9 = sbr.rel (0) target = $region5
    $region4: #{tpu_custom_call.1} parent=1 // pred_region
      %s11 = ssub.s32 512, 512
      %12 = vsyncadd [#allocation3], %s11
      %s14 = sshll.u32 [#allocation2], 4
      %s15 = int_to_ptr.vmem [resolvable:$true] %s14
      %17 = dma.hbm_to_vmem [thread:$0]  %s0, 512, %s15, [#allocation3]
    $region5: #{tpu_custom_call.1} parent=1 // pred_fallthru
      _
    // Predicated region
    $region6: #{tpu_custom_call.1} parent=1 // pred_check
      _
    $region7: #{tpu_custom_call.1} parent=1 // pred_check_branch
      %19 = sbr.rel (0) target = $region9
    $region8: #{tpu_custom_call.1} parent=1 // pred_region
      %20 = dma.done [#allocation3], 512
    $region9: #{tpu_custom_call.1} parent=1 // pred_fallthru
      _
    %v21 = vld [vmem:[#allocation2] sm:$0xff]
    %v22 = vld [vmem:[#allocation2 + $0x8] sm:$0xff]
    %v23 = vld [vmem:[#allocation2 + $0x10] sm:$0xff]
    %v24 = vld [vmem:[#allocation2 + $0x18] sm:$0xff]
    %25 = vrot.lane.b32.xlu0 %v21, 1
    %v26 = vpop.permute.xlu0 %25
    %27 = vrot.lane.b32.xlu0 %v22, 1
    %v28 = vpop.permute.xlu0 %27
    %29 = vrot.lane.b32.xlu0 %v23, 1
    %v30 = vpop.permute.xlu0 %29
    %31 = vrot.lane.b32.xlu0 %v24, 1
    %v32 = vpop.permute.xlu0 %31
    %v33 = vlaneseq
    %v34 = vand.u32 %v33, 127
    %vm35 = vcmp.lt.s32.totalorder %v34, 1
    %v36 = vsel %vm35, %v30, %v32
    %v37 = vsel %vm35, %v28, %v30
    %v38 = vsel %vm35, %v26, %v28
    %v39 = vsel %vm35, %v32, %v26
    %40 = vst [vmem:[#allocation5] sm:$0xff] %v39
    %41 = vst [vmem:[#allocation5 + $0x8] sm:$0xff] %v38
    %42 = vst [vmem:[#allocation5 + $0x10] sm:$0xff] %v37
    %43 = vst [vmem:[#allocation5 + $0x18] sm:$0xff] %v36
    %44 = vrot.lane.b32.xlu0 %v21, 15
    %v45 = vpop.permute.xlu0 %44
    %46 = vrot.lane.b32.xlu0 %v22, 15
    %v47 = vpop.permute.xlu0 %46
    %48 = vrot.lane.b32.xlu0 %v23, 15
    %v49 = vpop.permute.xlu0 %48
    %50 = vrot.lane.b32.xlu0 %v24, 15
    %v51 = vpop.permute.xlu0 %50
    %vm52 = vcmp.lt.s32.totalorder %v34, 15
    %v53 = vsel %vm52, %v49, %v51
    %v54 = vsel %vm52, %v47, %v49
    %v55 = vsel %vm52, %v45, %v47
    %v56 = vsel %vm52, %v51, %v45
    %s57 = scalar_lea.vmem [#allocation5], 32
    %58 = vst [vmem:[%s57] sm:$0xff] %v56
    %59 = vst [vmem:[%s57 + $0x8] sm:$0xff] %v55
    %60 = vst [vmem:[%s57 + $0x10] sm:$0xff] %v54
    %61 = vst [vmem:[%s57 + $0x18] sm:$0xff] %v53
    %62 = vrot.lane.b32.xlu0 %v21, 16
    %v63 = vpop.permute.xlu0 %62
    %64 = vrot.lane.b32.xlu0 %v22, 16
    %v65 = vpop.permute.xlu0 %64
    %66 = vrot.lane.b32.xlu0 %v23, 16
    %v67 = vpop.permute.xlu0 %66
    %68 = vrot.lane.b32.xlu0 %v24, 16
    %v69 = vpop.permute.xlu0 %68
    %vm70 = vcmp.lt.s32.totalorder %v34, 16
    %v71 = vsel %vm70, %v67, %v69
    %v72 = vsel %vm70, %v65, %v67
    %v73 = vsel %vm70, %v63, %v65
    %v74 = vsel %vm70, %v69, %v63
    %s75 = scalar_lea.vmem [#allocation5], 64
    %76 = vst [vmem:[%s75] sm:$0xff] %v74
    %77 = vst [vmem:[%s75 + $0x8] sm:$0xff] %v73
    %78 = vst [vmem:[%s75 + $0x10] sm:$0xff] %v72
    %79 = vst [vmem:[%s75 + $0x18] sm:$0xff] %v71
    %80 = vrot.lane.b32.xlu0 %v21, 17
    %v81 = vpop.permute.xlu0 %80
    %82 = vrot.lane.b32.xlu0 %v22, 17
    %v83 = vpop.permute.xlu0 %82
    %84 = vrot.lane.b32.xlu0 %v23, 17
    %v85 = vpop.permute.xlu0 %84
    %86 = vrot.lane.b32.xlu0 %v24, 17
    %v87 = vpop.permute.xlu0 %86
    %vm88 = vcmp.lt.s32.totalorder %v34, 17
    %v89 = vsel %vm88, %v85, %v87
    %v90 = vsel %vm88, %v83, %v85
    %v91 = vsel %vm88, %v81, %v83
    %v92 = vsel %vm88, %v87, %v81
    %s93 = scalar_lea.vmem [#allocation5], 96
    %94 = vst [vmem:[%s93] sm:$0xff] %v92
    %95 = vst [vmem:[%s93 + $0x8] sm:$0xff] %v91
    %96 = vst [vmem:[%s93 + $0x10] sm:$0xff] %v90
    %97 = vst [vmem:[%s93 + $0x18] sm:$0xff] %v89
    %98 = vrot.lane.b32.xlu0 %v21, 111
    %v99 = vpop.permute.xlu0 %98
    %100 = vrot.lane.b32.xlu0 %v22, 111
    %v101 = vpop.permute.xlu0 %100
    %102 = vrot.lane.b32.xlu0 %v23, 111
    %v103 = vpop.permute.xlu0 %102
    %104 = vrot.lane.b32.xlu0 %v24, 111
    %v105 = vpop.permute.xlu0 %104
    %vm106 = vcmp.lt.s32.totalorder %v34, 111
    %v107 = vsel %vm106, %v103, %v105
    %v108 = vsel %vm106, %v101, %v103
    %v109 = vsel %vm106, %v99, %v101
    %v110 = vsel %vm106, %v105, %v99
    %s111 = scalar_lea.vmem [#allocation5], 128
    %112 = vst [vmem:[%s111] sm:$0xff] %v109
    %113 = vst [vmem:[%s111 + $0x8] sm:$0xff] %v108
    %114 = vst [vmem:[%s111 + $0x10] sm:$0xff] %v107
    %115 = vst [vmem:[%s111 + $0x18] sm:$0xff] %v110
    %116 = vrot.lane.b32.xlu0 %v21, 112
    %v117 = vpop.permute.xlu0 %116
    %118 = vrot.lane.b32.xlu0 %v22, 112
    %v119 = vpop.permute.xlu0 %118
    %120 = vrot.lane.b32.xlu0 %v23, 112
    %v121 = vpop.permute.xlu0 %120
    %122 = vrot.lane.b32.xlu0 %v24, 112
    %v123 = vpop.permute.xlu0 %122
    %vm124 = vcmp.lt.s32.totalorder %v34, 112
    %v125 = vsel %vm124, %v121, %v123
    %v126 = vsel %vm124, %v119, %v121
    %v127 = vsel %vm124, %v117, %v119
    %v128 = vsel %vm124, %v123, %v117
    %s129 = scalar_lea.vmem [#allocation5], 160
    %130 = vst [vmem:[%s129] sm:$0xff] %v127
    %131 = vst [vmem:[%s129 + $0x8] sm:$0xff] %v126
    %132 = vst [vmem:[%s129 + $0x10] sm:$0xff] %v125
    %133 = vst [vmem:[%s129 + $0x18] sm:$0xff] %v128
    %134 = vrot.lane.b32.xlu0 %v21, 113
    %v135 = vpop.permute.xlu0 %134
    %136 = vrot.lane.b32.xlu0 %v22, 113
    %v137 = vpop.permute.xlu0 %136
    %138 = vrot.lane.b32.xlu0 %v23, 113
    %v139 = vpop.permute.xlu0 %138
    %140 = vrot.lane.b32.xlu0 %v24, 113
    %v141 = vpop.permute.xlu0 %140
    %vm142 = vcmp.lt.s32.totalorder %v34, 113
    %v143 = vsel %vm142, %v139, %v141
    %v144 = vsel %vm142, %v137, %v139
    %v145 = vsel %vm142, %v135, %v137
    %v146 = vsel %vm142, %v141, %v135
    %s147 = scalar_lea.vmem [#allocation5], 192
    %148 = vst [vmem:[%s147] sm:$0xff] %v145
    %149 = vst [vmem:[%s147 + $0x8] sm:$0xff] %v144
    %150 = vst [vmem:[%s147 + $0x10] sm:$0xff] %v143
    %151 = vst [vmem:[%s147 + $0x18] sm:$0xff] %v146
    %152 = vrot.lane.b32.xlu0 %v21, 127
    %v153 = vpop.permute.xlu0 %152
    %154 = vrot.lane.b32.xlu0 %v22, 127
    %v155 = vpop.permute.xlu0 %154
    %156 = vrot.lane.b32.xlu0 %v23, 127
    %v157 = vpop.permute.xlu0 %156
    %158 = vrot.lane.b32.xlu0 %v24, 127
    %v159 = vpop.permute.xlu0 %158
    %vm160 = vcmp.lt.s32.totalorder %v34, 127
    %v161 = vsel %vm160, %v157, %v159
    %v162 = vsel %vm160, %v155, %v157
    %v163 = vsel %vm160, %v153, %v155
    %v164 = vsel %vm160, %v159, %v153
    %s165 = scalar_lea.vmem [#allocation5], 224
    %166 = vst [vmem:[%s165] sm:$0xff] %v163
    %167 = vst [vmem:[%s165 + $0x8] sm:$0xff] %v162
    %168 = vst [vmem:[%s165 + $0x10] sm:$0xff] %v161
    %169 = vst [vmem:[%s165 + $0x18] sm:$0xff] %v164
    // Predicated region
    $region10: #{tpu_custom_call.1} parent=1 // pred_check
      _
    $region11: #{tpu_custom_call.1} parent=1 // pred_check_branch
      %171 = sbr.rel (0) target = $region13
    $region12: #{tpu_custom_call.1} parent=1 // pred_region
      %s173 = ssub.s32 4096, 4096
      %174 = vsyncadd [#allocation4], %s173
      %s175 = sshll.u32 [#allocation5], 4
      %s176 = int_to_ptr.vmem [resolvable:$true] %s175
      %181 = dma.vmem_to_hbm [thread:$0]  %s176, 4096, %s1, [#allocation4], 512, 512, 32
    $region13: #{tpu_custom_call.1} parent=1 // pred_fallthru
      _
    // Predicated region
    $region14: #{tpu_custom_call.1} parent=1 // pred_check
      _
    $region15: #{tpu_custom_call.1} parent=1 // pred_check_branch
      %183 = sbr.rel (0) target = $region17
    $region16: #{tpu_custom_call.1} parent=1 // pred_region
      %184 = dma.done [#allocation4], 4096
    $region17: #{tpu_custom_call.1} parent=1 // pred_fallthru
      _
    %185 = vsyncpa [#allocation3], 1
    %186 = vsyncpa [#allocation4], 1

// kernel: inception_forward.1
$region0: #{inception_forward.1}
  #allocation0 [shape = 'u32[]', space=smem, size = 0x4, offset = 0x4, fixed_abs, tag = 'smem constant byte address 0x4 - core index']
  #allocation1 [shape = 'u32[144,128]{1,0:T(1,128)}', space=vmem, size = 0x12000, scoped, tag = 'internal scratch']
  %s0 = inlined_call_operand.vmem [shape: f32[2,4,512], index: 0, kind: input, shape index: {}]
  %s1 = inlined_call_operand.vmem [shape: f32[9,512], index: 1, kind: input, shape index: {}]
  %s2 = inlined_call_operand.vmem [shape: bf16[16,4], index: 2, kind: input, shape index: {}]
  %s3 = inlined_call_operand.vmem [shape: f32[16,1], index: 3, kind: input, shape index: {}]
  %s4 = inlined_call_operand.vmem [shape: f32[16,1], index: 4, kind: input, shape index: {}]
  %s5 = inlined_call_operand.vmem [shape: bf16[24,76], index: 5, kind: input, shape index: {}]
  %s6 = inlined_call_operand.vmem [shape: f32[24,1], index: 6, kind: input, shape index: {}]
  %s7 = inlined_call_operand.vmem [shape: f32[24,1], index: 7, kind: input, shape index: {}]
  %s8 = inlined_call_operand.vmem [shape: f32[2,32,512], index: 8, kind: output, shape index: {}]
  %s9 = sld [smem:[#allocation0]]
  $region65: #{inception_forward.1} parent=0
    _
  %s11 = ssub.s32 1, %s9
  %s12 = scalar_select 0, %s11, %s9
  loop: start=0, step=1, limit=4
  $region2: #{inception_forward.1} parent=0 // loop_pre_header
    _
  $region3: #{inception_forward.1} parent=0 // loop_header
    %s14 = sphi 0, %s18
    %p15 = scmp.ge.s32.totalorder %s14, 4
    %s24 = sphi 0, %s26
    %s27 = sphi 0, %s24
    %s28 = sphi 0, %s27
    %s44 = sphi 0, %s28
    %s48 = sphi 0, %s48
    %s50 = sphi 0, %s48
    %s51 = sphi 0, %s50
    %s65 = sphi 0, %s51
    %s69 = sphi 0, %s69
    %s71 = sphi 0, %s69
    %s72 = sphi 0, %s71
    %s86 = sphi 0, %s72
    %s90 = sphi 0, %s90
    %s92 = sphi 0, %s90
    %s93 = sphi 0, %s92
    %s107 = sphi 0, %s93
    %s111 = sphi 0, %s111
    %s113 = sphi 0, %s111
    %s114 = sphi 0, %s113
    %s128 = sphi 0, %s114
    %s132 = sphi 0, %s132
    %s134 = sphi 0, %s132
    %s135 = sphi 0, %s134
    %s149 = sphi 0, %s135
    %s153 = sphi 0, %s153
    %s155 = sphi 0, %s153
    %s156 = sphi 0, %s155
    %s170 = sphi 0, %s156
    %s174 = sphi 0, %s174
    %s176 = sphi 0, %s174
    %s177 = sphi 0, %s176
    %s191 = sphi 0, %s177
    %s197 = sphi 0, %s199
    %s200 = sphi 0, %s197
    %s201 = sphi 0, %s200
    %s217 = sphi 0, %s201
  $region4: #{inception_forward.1} parent=0 // loop_header_branch
    %17 = sbr.rel (%p15) target = $region8
  $region5: #{inception_forward.1} parent=0 // loop_body
    %s19 = ssub.s32 %s14, 1
    %s20 = ssub.s32 %s14, 2
    %s21 = sadd.s32 %s14, 1
    %s22 = ssub.s32 %s14, %s21
    %p23 = scmp.eq.s32.totalorder %s22, 0
    %s25 = sadd.s32 %s24, 1
    %s26 = scalar_select %p23, %s24, %s25
    %p29 = pneg %p23
    %p30 = scmp.eq.s32.totalorder %s14, 1
    %p31 = por %p29, %p30
    %p32 = scmp.ne.s32.totalorder %s24, %s27
    %p33 = scmp.eq.s32.totalorder %s14, 0
    %p34 = por %p32, %p33
    %p35 = scmp.ne.s32.totalorder %s24, %s27
    %p36 = scmp.eq.s32.totalorder %s19, 1
    %p37 = por %p35, %p36
    %p38 = scmp.ne.s32.totalorder %s27, %s28
    %p39 = scmp.eq.s32.totalorder %s19, 0
    %p40 = por %p38, %p39
    %p41 = scmp.ne.s32.totalorder %s27, %s28
    %p42 = scmp.eq.s32.totalorder %s20, 1
    %p43 = por %p41, %p42
    %p45 = scmp.ne.s32.totalorder %s28, %s44
    %p46 = scmp.eq.s32.totalorder %s20, 0
    %p47 = por %p45, %p46
    %s49 = sadd.s32 %s48, 1
    %p52 = scmp.eq.s32.totalorder %s14, 1
    %p53 = scmp.ne.s32.totalorder %s48, %s50
    %p54 = scmp.eq.s32.totalorder %s14, 0
    %p55 = por %p53, %p54
    %p56 = scmp.ne.s32.totalorder %s48, %s50
    %p57 = scmp.eq.s32.totalorder %s19, 1
    %p58 = por %p56, %p57
    %p59 = scmp.ne.s32.totalorder %s50, %s51
    %p60 = scmp.eq.s32.totalorder %s19, 0
    %p61 = por %p59, %p60
    %p62 = scmp.ne.s32.totalorder %s50, %s51
    %p63 = scmp.eq.s32.totalorder %s20, 1
    %p64 = por %p62, %p63
    %p66 = scmp.ne.s32.totalorder %s51, %s65
    %p67 = scmp.eq.s32.totalorder %s20, 0
    %p68 = por %p66, %p67
    %s70 = sadd.s32 %s69, 1
    %p73 = scmp.eq.s32.totalorder %s14, 1
    %p74 = scmp.ne.s32.totalorder %s69, %s71
    %p75 = scmp.eq.s32.totalorder %s14, 0
    %p76 = por %p74, %p75
    %p77 = scmp.ne.s32.totalorder %s69, %s71
    %p78 = scmp.eq.s32.totalorder %s19, 1
    %p79 = por %p77, %p78
    %p80 = scmp.ne.s32.totalorder %s71, %s72
    %p81 = scmp.eq.s32.totalorder %s19, 0
    %p82 = por %p80, %p81
    %p83 = scmp.ne.s32.totalorder %s71, %s72
    %p84 = scmp.eq.s32.totalorder %s20, 1
    %p85 = por %p83, %p84
    %p87 = scmp.ne.s32.totalorder %s72, %s86
    %p88 = scmp.eq.s32.totalorder %s20, 0
    %p89 = por %p87, %p88
    %s91 = sadd.s32 %s90, 1
    %p94 = scmp.eq.s32.totalorder %s14, 1
    %p95 = scmp.ne.s32.totalorder %s90, %s92
    %p96 = scmp.eq.s32.totalorder %s14, 0
    %p97 = por %p95, %p96
    %p98 = scmp.ne.s32.totalorder %s90, %s92
    %p99 = scmp.eq.s32.totalorder %s19, 1
    %p100 = por %p98, %p99
    %p101 = scmp.ne.s32.totalorder %s92, %s93
    %p102 = scmp.eq.s32.totalorder %s19, 0
    %p103 = por %p101, %p102
    %p104 = scmp.ne.s32.totalorder %s92, %s93
    %p105 = scmp.eq.s32.totalorder %s20, 1
    %p106 = por %p104, %p105
    %p108 = scmp.ne.s32.totalorder %s93, %s107
    %p109 = scmp.eq.s32.totalorder %s20, 0
    %p110 = por %p108, %p109
    %s112 = sadd.s32 %s111, 1
    %p115 = scmp.eq.s32.totalorder %s14, 1
    %p116 = scmp.ne.s32.totalorder %s111, %s113
    %p117 = scmp.eq.s32.totalorder %s14, 0
    %p118 = por %p116, %p117
    %p119 = scmp.ne.s32.totalorder %s111, %s113
    %p120 = scmp.eq.s32.totalorder %s19, 1
    %p121 = por %p119, %p120
    %p122 = scmp.ne.s32.totalorder %s113, %s114
    %p123 = scmp.eq.s32.totalorder %s19, 0
    %p124 = por %p122, %p123
    %p125 = scmp.ne.s32.totalorder %s113, %s114
    %p126 = scmp.eq.s32.totalorder %s20, 1
    %p127 = por %p125, %p126
    %p129 = scmp.ne.s32.totalorder %s114, %s128
    %p130 = scmp.eq.s32.totalorder %s20, 0
    %p131 = por %p129, %p130
    %s133 = sadd.s32 %s132, 1
    %p136 = scmp.eq.s32.totalorder %s14, 1
    %p137 = scmp.ne.s32.totalorder %s132, %s134
    %p138 = scmp.eq.s32.totalorder %s14, 0
    %p139 = por %p137, %p138
    %p140 = scmp.ne.s32.totalorder %s132, %s134
    %p141 = scmp.eq.s32.totalorder %s19, 1
    %p142 = por %p140, %p141
    %p143 = scmp.ne.s32.totalorder %s134, %s135
    %p144 = scmp.eq.s32.totalorder %s19, 0
    %p145 = por %p143, %p144
    %p146 = scmp.ne.s32.totalorder %s134, %s135
    %p147 = scmp.eq.s32.totalorder %s20, 1
    %p148 = por %p146, %p147
    %p150 = scmp.ne.s32.totalorder %s135, %s149
    %p151 = scmp.eq.s32.totalorder %s20, 0
    %p152 = por %p150, %p151
    %s154 = sadd.s32 %s153, 1
    %p157 = scmp.eq.s32.totalorder %s14, 1
    %p158 = scmp.ne.s32.totalorder %s153, %s155
    %p159 = scmp.eq.s32.totalorder %s14, 0
    %p160 = por %p158, %p159
    %p161 = scmp.ne.s32.totalorder %s153, %s155
    %p162 = scmp.eq.s32.totalorder %s19, 1
    %p163 = por %p161, %p162
    %p164 = scmp.ne.s32.totalorder %s155, %s156
    %p165 = scmp.eq.s32.totalorder %s19, 0
    %p166 = por %p164, %p165
    %p167 = scmp.ne.s32.totalorder %s155, %s156
    %p168 = scmp.eq.s32.totalorder %s20, 1
    %p169 = por %p167, %p168
    %p171 = scmp.ne.s32.totalorder %s156, %s170
    %p172 = scmp.eq.s32.totalorder %s20, 0
    %p173 = por %p171, %p172
    %s175 = sadd.s32 %s174, 1
    %p178 = scmp.eq.s32.totalorder %s14, 1
    %p179 = scmp.ne.s32.totalorder %s174, %s176
    %p180 = scmp.eq.s32.totalorder %s14, 0
    %p181 = por %p179, %p180
    %p182 = scmp.ne.s32.totalorder %s174, %s176
    %p183 = scmp.eq.s32.totalorder %s19, 1
    %p184 = por %p182, %p183
    %p185 = scmp.ne.s32.totalorder %s176, %s177
    %p186 = scmp.eq.s32.totalorder %s19, 0
    %p187 = por %p185, %p186
    %p188 = scmp.ne.s32.totalorder %s176, %s177
    %p189 = scmp.eq.s32.totalorder %s20, 1
    %p190 = por %p188, %p189
    %p192 = scmp.ne.s32.totalorder %s177, %s191
    %p193 = scmp.eq.s32.totalorder %s20, 0
    %p194 = por %p192, %p193
    %s195 = ssub.s32 %s14, %s21
    %p196 = scmp.eq.s32.totalorder %s195, 0
    %s198 = sadd.s32 %s197, 1
    %s199 = scalar_select %p196, %s197, %s198
    %p202 = pneg %p196
    %p203 = scmp.eq.s32.totalorder %s14, 1
    %p204 = por %p202, %p203
    %p205 = scmp.ne.s32.totalorder %s197, %s200
    %p206 = scmp.eq.s32.totalorder %s14, 0
    %p207 = por %p205, %p206
    %p208 = scmp.ne.s32.totalorder %s197, %s200
    %p209 = scmp.eq.s32.totalorder %s19, 1
    %p210 = por %p208, %p209
    %p211 = scmp.ne.s32.totalorder %s200, %s201
    %p212 = scmp.eq.s32.totalorder %s19, 0
    %p213 = por %p211, %p212
    %p214 = scmp.ne.s32.totalorder %s200, %s201
    %p215 = scmp.eq.s32.totalorder %s20, 1
    %p216 = por %p214, %p215
    %p218 = scmp.ne.s32.totalorder %s201, %s217
    %p219 = scmp.eq.s32.totalorder %s20, 0
    %p220 = por %p218, %p219
    %p221 = scmp.le.s32.totalorder 1, %s14
    %p222 = scmp.lt.s32.totalorder %s14, 3
    %p223 = pnand %p221, %p222
    %p224 = pneg %p223
    // Predicated region
    $region9: #{inception_forward.1} parent=5 // pred_check
      _
    $region10: #{inception_forward.1} parent=5 // pred_check_branch
      %226 = sbr.rel (%p223) target = $region12
    $region11: #{inception_forward.1} parent=5 // pred_region
      %s227 = ssub.s32 %s14, 1
      // Predicated region
      $region13: #{inception_forward.1} parent=11 // pred_check
        %p228 = pneg %p61
      $region14: #{inception_forward.1} parent=11 // pred_check_branch
        %230 = sbr.rel (%p228) target = $region16
      $region15: #{inception_forward.1} parent=11 // pred_region
        _
      $region16: #{inception_forward.1} parent=11 // pred_fallthru
        _
      // Predicated region
      $region17: #{inception_forward.1} parent=11 // pred_check
        %p231 = pneg %p82
      $region18: #{inception_forward.1} parent=11 // pred_check_branch
        %233 = sbr.rel (%p231) target = $region20
      $region19: #{inception_forward.1} parent=11 // pred_region
        _
      $region20: #{inception_forward.1} parent=11 // pred_fallthru
        _
      // Predicated region
      $region21: #{inception_forward.1} parent=11 // pred_check
        %p234 = pneg %p103
      $region22: #{inception_forward.1} parent=11 // pred_check_branch
        %236 = sbr.rel (%p234) target = $region24
      $region23: #{inception_forward.1} parent=11 // pred_region
        _
      $region24: #{inception_forward.1} parent=11 // pred_fallthru
        _
      // Predicated region
      $region25: #{inception_forward.1} parent=11 // pred_check
        %p237 = pneg %p124
      $region26: #{inception_forward.1} parent=11 // pred_check_branch
        %239 = sbr.rel (%p237) target = $region28
      $region27: #{inception_forward.1} parent=11 // pred_region
        _
      $region28: #{inception_forward.1} parent=11 // pred_fallthru
        _
      // Predicated region
      $region29: #{inception_forward.1} parent=11 // pred_check
        %p240 = pneg %p145
      $region30: #{inception_forward.1} parent=11 // pred_check_branch
        %242 = sbr.rel (%p240) target = $region32
      $region31: #{inception_forward.1} parent=11 // pred_region
        _
      $region32: #{inception_forward.1} parent=11 // pred_fallthru
        _
      // Predicated region
      $region33: #{inception_forward.1} parent=11 // pred_check
        %p243 = pneg %p166
      $region34: #{inception_forward.1} parent=11 // pred_check_branch
        %245 = sbr.rel (%p243) target = $region36
      $region35: #{inception_forward.1} parent=11 // pred_region
        _
      $region36: #{inception_forward.1} parent=11 // pred_fallthru
        _
      // Predicated region
      $region37: #{inception_forward.1} parent=11 // pred_check
        %p246 = pneg %p187
      $region38: #{inception_forward.1} parent=11 // pred_check_branch
        %248 = sbr.rel (%p246) target = $region40
      $region39: #{inception_forward.1} parent=11 // pred_region
        _
      $region40: #{inception_forward.1} parent=11 // pred_fallthru
        _
    $region12: #{inception_forward.1} parent=5 // pred_fallthru
      _
    %p249 = scmp.lt.s32.totalorder %s14, 2
    // Predicated region
    $region41: #{inception_forward.1} parent=5 // pred_check
      %p250 = pneg %p249
    $region42: #{inception_forward.1} parent=5 // pred_check_branch
      %252 = sbr.rel (%p250) target = $region44
    $region43: #{inception_forward.1} parent=5 // pred_region
      // Predicated region
      $region45: #{inception_forward.1} parent=43 // pred_check
        %p253 = pneg %p34
      $region46: #{inception_forward.1} parent=43 // pred_check_branch
        %255 = sbr.rel (%p253) target = $region48
      $region47: #{inception_forward.1} parent=43 // pred_region
        %p256 = scmp.lt.s32.totalorder %s14, 1
        %s257 = scalar_select %p256, %s14, 1
        %s258 = smul.addr %s257, 4
        %s259 = smul.addr %s258, 4
        %s260 = scalar_lea.vmem %s0, %s259
      $region48: #{inception_forward.1} parent=43 // pred_fallthru
        _
    $region44: #{inception_forward.1} parent=5 // pred_fallthru
      _
    %p261 = scmp.le.s32.totalorder 1, %s14
    %p262 = scmp.lt.s32.totalorder %s14, 3
    %p263 = pnand %p261, %p262
    %p264 = pneg %p263
    // Predicated region
    $region49: #{inception_forward.1} parent=5 // pred_check
      _
    $region50: #{inception_forward.1} parent=5 // pred_check_branch
      %266 = sbr.rel (%p263) target = $region52
    $region51: #{inception_forward.1} parent=5 // pred_region
      %s267 = ssub.s32 %s14, 1
      %p268 = scmp.lt.s32.totalorder %s19, 1
      %s269 = scalar_select %p268, %s19, 1
      %s270 = smul.addr %s269, 4
      %s271 = smul.addr %s270, 4
      %s272 = scalar_lea.vmem %s0, %s271
      %p273 = pneg %p40
      %p274 = pneg %p37
      %p275 = pneg %p61
      %p276 = pneg %p58
      %p277 = pneg %p82
      %p278 = pneg %p79
      %p279 = pneg %p103
      %p280 = pneg %p100
      %p281 = pneg %p124
      %p282 = pneg %p121
      %p283 = pneg %p145
      %p284 = pneg %p142
      %p285 = pneg %p166
      %p286 = pneg %p163
      %p287 = pneg %p187
      %p288 = pneg %p184
      %p289 = pneg %p213
      %p290 = pneg %p210
      %p291 = scmp.lt.s32.totalorder %s19, 1
      %s292 = scalar_select %p291, %s19, 1
      %s293 = smul.addr %s292, 16
      %s294 = smul.addr %s293, 8
      %s295 = scalar_lea.vmem %s8, %s294
      %p296 = scmp.lt.s32.totalorder %s19, 1
      %s297 = scalar_select %p296, %s19, 1
      %s298 = smul.addr %s297, 4
      %s299 = smul.addr %s298, 4
      %s300 = scalar_lea.vmem %s0, %s299
      %p301 = scmp.lt.s32.totalorder %s19, 1
      %s302 = scalar_select %p301, %s19, 1
      %s303 = smul.addr %s302, 16
      %s304 = smul.addr %s303, 8
      %s305 = scalar_lea.vmem %s8, %s304
      %v307 = vld [vmem:[%s300] sm:$0xff]
      %v308 = vld [vmem:[%s300 + $0x8] sm:$0xff]
      %v309 = vld [vmem:[%s2] sm:$0xf]
      %v310 = vld [vmem:[%s2 + $0x4] sm:$0xf]
      %v313 = vcombine.high %v307, %v307
      %v314 = vcombine.high %v308, %v308
      %v317 = vpack.c.bf16 %v307, %v307
      %v318 = vpack.c.bf16 %v313, %v313
      %v319 = vpack.c.bf16 %v308, %v308
      %v320 = vpack.c.bf16 %v314, %v314
      %v323 = vunpack.c.l.b16 %v309
      %v324 = vunpack.c.l.b16 %v310
      %v325 = vpack.c.b16 %v324, %v323
      %vm326 = vcmask 31744
      %v328 = vsel %vm326, %v325, 0
      %vm330 = vcmask 1041408
      %v332 = vsel %vm330, %v317, 0
      %v335 = vsel %vm330, %v318, 0
      %v338 = vsel %vm330, %v319, 0
      %v341 = vsel %vm330, %v320, 0
      %343 = vmatprep.subr.bf16.mxu0 %v335
      %344 = vmatpush1.bf16.msra.mxu0 %v332
      %345 = vmatprep.subr.bf16.mxu0 0
      %346 = vmatpush1.bf16.msra.mxu0 0
      %347 = vmatprep.subr.bf16.mxu0 0
      %348 = vmatpush1.bf16.msra.mxu0 0
      %349 = vmatprep.subr.bf16.mxu0 0
      %350 = vmatpush1.bf16.msra.mxu0 0
      %351 = vmatprep.subr.bf16.mxu0 0
      %352 = vmatpush1.bf16.msra.mxu0 0
      %353 = vmatprep.subr.bf16.mxu0 0
      %354 = vmatpush1.bf16.msra.mxu0 0
      %355 = vmatprep.subr.bf16.mxu0 0
      %356 = vmatpush1.bf16.msra.mxu0 0
      %357 = vmatprep.subr.bf16.mxu0 0
      %358 = vmatpush1.bf16.msra.mxu0 0
      %359 = vmatprep.subr.bf16.mxu0 0
      %360 = vmatpush1.bf16.msra.mxu0 0
      %361 = vmatprep.subr.bf16.mxu0 0
      %362 = vmatpush1.bf16.msra.mxu0 0
      %363 = vmatprep.subr.bf16.mxu0 0
      %364 = vmatpush1.bf16.msra.mxu0 0
      %365 = vmatprep.subr.bf16.mxu0 0
      %366 = vmatpush1.bf16.msra.mxu0 0
      %367 = vmatprep.subr.bf16.mxu0 0
      %368 = vmatpush1.bf16.msra.mxu0 0
      %369 = vmatprep.subr.bf16.mxu0 0
      %370 = vmatpush1.bf16.msra.mxu0 0
      %371 = vmatprep.subr.bf16.mxu0 0
      %372 = vmatpush1.bf16.msra.mxu0 0
      %373 = vmatprep.subr.bf16.mxu0 0
      %374 = vmatpush1.bf16.msra.mxu0 0
      %375 = vmatprep.mubr.bf16.mxu0 0
      %376 = vmatmul.mubr.bf16.gmra.mrb[0].mxu0 %v328
      %v377 = vpop.f32.mrb[0].mxu0
      %v378 = vadd.f32 0.0, %v377
      %v379 = vpop.f32.mrb[0].mxu0
      %v380 = vadd.f32 0.0, %v379
      %v381 = vpop.f32.mrb[0].mxu0
      %v382 = vadd.f32 0.0, %v381
      %v383 = vpop.f32.mrb[0].mxu0
      %v384 = vadd.f32 0.0, %v383
      %385 = vdwg.mxu0
      %386 = vmatprep.subr.bf16.mxu0 %v341
      %387 = vmatpush1.bf16.msra.mxu0 %v338
      %388 = vmatprep.subr.bf16.mxu0 0
      %389 = vmatpush1.bf16.msra.mxu0 0
      %390 = vmatprep.subr.bf16.mxu0 0
      %391 = vmatpush1.bf16.msra.mxu0 0
      %392 = vmatprep.subr.bf16.mxu0 0
      %393 = vmatpush1.bf16.msra.mxu0 0
      %394 = vmatprep.subr.bf16.mxu0 0
      %395 = vmatpush1.bf16.msra.mxu0 0
      %396 = vmatprep.subr.bf16.mxu0 0
      %397 = vmatpush1.bf16.msra.mxu0 0
      %398 = vmatprep.subr.bf16.mxu0 0
      %399 = vmatpush1.bf16.msra.mxu0 0
      %400 = vmatprep.subr.bf16.mxu0 0
      %401 = vmatpush1.bf16.msra.mxu0 0
      %402 = vmatprep.subr.bf16.mxu0 0
      %403 = vmatpush1.bf16.msra.mxu0 0
      %404 = vmatprep.subr.bf16.mxu0 0
      %405 = vmatpush1.bf16.msra.mxu0 0
      %406 = vmatprep.subr.bf16.mxu0 0
      %407 = vmatpush1.bf16.msra.mxu0 0
      %408 = vmatprep.subr.bf16.mxu0 0
      %409 = vmatpush1.bf16.msra.mxu0 0
      %410 = vmatprep.subr.bf16.mxu0 0
      %411 = vmatpush1.bf16.msra.mxu0 0
      %412 = vmatprep.subr.bf16.mxu0 0
      %413 = vmatpush1.bf16.msra.mxu0 0
      %414 = vmatprep.subr.bf16.mxu0 0
      %415 = vmatpush1.bf16.msra.mxu0 0
      %416 = vmatprep.subr.bf16.mxu0 0
      %417 = vmatpush1.bf16.msra.mxu0 0
      %418 = vmatprep.mubr.bf16.mxu0 0
      %419 = vmatmul.mubr.bf16.gmra.mrb[0].mxu0 %v328
      %v420 = vpop.f32.mrb[0].mxu0
      %v421 = vadd.f32 0.0, %v420
      %v422 = vpop.f32.mrb[0].mxu0
      %v423 = vadd.f32 0.0, %v422
      %v424 = vpop.f32.mrb[0].mxu0
      %v425 = vadd.f32 0.0, %v424
      %v426 = vpop.f32.mrb[0].mxu0
      %v427 = vadd.f32 0.0, %v426
      %428 = vdwg.mxu0
      %v429 = vld [vmem:[%s3] sm:$0xff]
      %v430 = vld [vmem:[%s3 + $0x8] sm:$0xff]
      %432 = vset.pattern.permute.xlu0 0
      %433 = vperm.xlu0 %432, %v429
      %v434 = vpop.permute.xlu0 %433
      %437 = vset.pattern.permute.xlu0 0
      %438 = vperm.xlu0 %437, %v430
      %v439 = vpop.permute.xlu0 %438
      %v441 = vmul.f32 %v378, %v434
      %v442 = vmul.f32 %v380, %v434
      %v443 = vmul.f32 %v421, %v434
      %v444 = vmul.f32 %v423, %v434
      %v445 = vmul.f32 %v382, %v439
      %v446 = vmul.f32 %v384, %v439
      %v447 = vmul.f32 %v425, %v439
      %v448 = vmul.f32 %v427, %v439
      %v449 = vld [vmem:[%s4] sm:$0xff]
      %v450 = vld [vmem:[%s4 + $0x8] sm:$0xff]
      %452 = vset.pattern.permute.xlu0 0
      %453 = vperm.xlu0 %452, %v449
      %v454 = vpop.permute.xlu0 %453
      %457 = vset.pattern.permute.xlu0 0
      %458 = vperm.xlu0 %457, %v450
      %v459 = vpop.permute.xlu0 %458
      %v461 = vadd.f32 %v441, %v454
      %v462 = vadd.f32 %v442, %v454
      %v463 = vadd.f32 %v443, %v454
      %v464 = vadd.f32 %v444, %v454
      %v465 = vadd.f32 %v445, %v459
      %v466 = vadd.f32 %v446, %v459
      %v467 = vadd.f32 %v447, %v459
      %v468 = vadd.f32 %v448, %v459
      %v469 = vmax.f32 %v461, 0.0
      %v470 = vmax.f32 %v462, 0.0
      %v471 = vmax.f32 %v463, 0.0
      %v472 = vmax.f32 %v464, 0.0
      %v473 = vmax.f32 %v465, 0.0
      %v474 = vmax.f32 %v466, 0.0
      %v475 = vmax.f32 %v467, 0.0
      %v476 = vmax.f32 %v468, 0.0
      %477 = vst [vmem:[%s305] sm:$0xff] %v469
      %478 = vst [vmem:[%s305 + $0x8] sm:$0xff] %v470
      %479 = vst [vmem:[%s305 + $0x10] sm:$0xff] %v471
      %480 = vst [vmem:[%s305 + $0x18] sm:$0xff] %v472
      %v481 = vld [vmem:[%s1] ss:$8 sm:$0xf]
      %483 = vrot.lane.b32.xlu0 %v476, 17
      %v484 = vpop.permute.xlu0 %483
      %489 = vrot.lane.b32.xlu0 %v473, 17
      %v490 = vpop.permute.xlu0 %489
      %491 = vrot.lane.b32.xlu0 %v474, 17
      %v492 = vpop.permute.xlu0 %491
      %493 = vrot.lane.b32.xlu0 %v475, 17
      %v494 = vpop.permute.xlu0 %493
      %vm495 = vcmask 138240
      %v496 = vsel %vm495, %v490, %v492
      %v497 = vsel %vm495, %v492, %v494
      %v498 = vsel %vm495, %v494, %v484
      %v503 = vsel %vm495, %v484, %v490
      %v505 = vlaneseq
      %v506 = vshrl.u32 %v505, 7
      %v507 = vsub.s32 0, %v506
      %v508 = vrot.slane %v481, %v507
      %v509 = vlaneseq
      %v510 = vshrl.u32 %v509, 7
      %v511 = vsub.s32 1, %v510
      %v512 = vrot.slane %v481, %v511
      %v513 = vlaneseq
      %v514 = vshrl.u32 %v513, 7
      %v515 = vsub.s32 2, %v514
      %v516 = vrot.slane %v481, %v515
      %v517 = vlaneseq
      %v518 = vshrl.u32 %v517, 7
      %v519 = vsub.s32 3, %v518
      %v520 = vrot.slane %v481, %v519
      %v525 = vmul.f32 %v503, %v508
      %v526 = vmul.f32 %v496, %v512
      %v527 = vmul.f32 %v497, %v516
      %v528 = vmul.f32 %v498, %v520
      %vm529 = vcmp.gt.f32.partialorder %v481, 0.5
      %530 = vrot.lane.b32.xlu0 %v314, 17
      %v531 = vpop.permute.xlu0 %530
      %533 = vrot.lane.b32.xlu0 %v307, 17
      %v534 = vpop.permute.xlu0 %533
      %535 = vrot.lane.b32.xlu0 %v313, 17
      %v536 = vpop.permute.xlu0 %535
      %537 = vrot.lane.b32.xlu0 %v308, 17
      %v538 = vpop.permute.xlu0 %537
      %v539 = vsel %vm495, %v534, %v536
      %v540 = vsel %vm495, %v536, %v538
      %v541 = vsel %vm495, %v538, %v531
      %v546 = vsel %vm495, %v531, %v534
      %v547 = vsel %vm529, 1, 0
      %v548 = vlaneseq
      %v549 = vshrl.u32 %v548, 7
      %v550 = vsub.s32 0, %v549
      %v551 = vrot.slane %v547, %v550
      %v552 = vlaneseq
      %v553 = vshrl.u32 %v552, 7
      %v554 = vsub.s32 1, %v553
      %v555 = vrot.slane %v547, %v554
      %v556 = vlaneseq
      %v557 = vshrl.u32 %v556, 7
      %v558 = vsub.s32 2, %v557
      %v559 = vrot.slane %v547, %v558
      %v560 = vlaneseq
      %v561 = vshrl.u32 %v560, 7
      %v562 = vsub.s32 3, %v561
      %v563 = vrot.slane %v547, %v562
      %vm564 = vcmp.eq.s32.totalorder %v551, 1
      %vm565 = vcmp.eq.s32.totalorder %v555, 1
      %vm566 = vcmp.eq.s32.totalorder %v559, 1
      %vm567 = vcmp.eq.s32.totalorder %v563, 1
      %v568 = vsel %vm564, %v546, %v307
      %v569 = vsel %vm565, %v539, %v313
      %v570 = vsel %vm566, %v540, %v308
      %v571 = vsel %vm567, %v541, %v314
      %v576 = vcombine.low %v568, %v569
      %v577 = vcombine.low %v570, %v571
      %v580 = vmax.f32 %v307, %v576
      %v581 = vmax.f32 %v308, %v577
      %s582 = scalar_lea.vmem %s1, 1
      %v583 = vld [vmem:[%s582] ss:$8 sm:$0xf]
      %584 = vrot.lane.b32.xlu0 %v476, 16
      %v585 = vpop.permute.xlu0 %584
      %587 = vrot.lane.b32.xlu0 %v473, 16
      %v588 = vpop.permute.xlu0 %587
      %589 = vrot.lane.b32.xlu0 %v474, 16
      %v590 = vpop.permute.xlu0 %589
      %591 = vrot.lane.b32.xlu0 %v475, 16
      %v592 = vpop.permute.xlu0 %591
      %vm593 = vcmask 130048
      %v594 = vsel %vm593, %v588, %v590
      %v595 = vsel %vm593, %v590, %v592
      %v596 = vsel %vm593, %v592, %v585
      %v601 = vsel %vm593, %v585, %v588
      %v603 = vlaneseq
      %v604 = vshrl.u32 %v603, 7
      %v605 = vsub.s32 0, %v604
      %v606 = vrot.slane %v583, %v605
      %v607 = vlaneseq
      %v608 = vshrl.u32 %v607, 7
      %v609 = vsub.s32 1, %v608
      %v610 = vrot.slane %v583, %v609
      %v611 = vlaneseq
      %v612 = vshrl.u32 %v611, 7
      %v613 = vsub.s32 2, %v612
      %v614 = vrot.slane %v583, %v613
      %v615 = vlaneseq
      %v616 = vshrl.u32 %v615, 7
      %v617 = vsub.s32 3, %v616
      %v618 = vrot.slane %v583, %v617
      %v623 = vmul.f32 %v601, %v606
      %v624 = vmul.f32 %v594, %v610
      %v625 = vmul.f32 %v595, %v614
      %v626 = vmul.f32 %v596, %v618
      %vm627 = vcmp.gt.f32.partialorder %v583, 0.5
      %628 = vrot.lane.b32.xlu0 %v314, 16
      %v629 = vpop.permute.xlu0 %628
      %631 = vrot.lane.b32.xlu0 %v307, 16
      %v632 = vpop.permute.xlu0 %631
      %633 = vrot.lane.b32.xlu0 %v313, 16
      %v634 = vpop.permute.xlu0 %633
      %635 = vrot.lane.b32.xlu0 %v308, 16
      %v636 = vpop.permute.xlu0 %635
      %v637 = vsel %vm593, %v632, %v634
      %v638 = vsel %vm593, %v634, %v636
      %v639 = vsel %vm593, %v636, %v629
      %v644 = vsel %vm593, %v629, %v632
      %v645 = vsel %vm627, 1, 0
      %v646 = vlaneseq
      %v647 = vshrl.u32 %v646, 7
      %v648 = vsub.s32 0, %v647
      %v649 = vrot.slane %v645, %v648
      %v650 = vlaneseq
      %v651 = vshrl.u32 %v650, 7
      %v652 = vsub.s32 1, %v651
      %v653 = vrot.slane %v645, %v652
      %v654 = vlaneseq
      %v655 = vshrl.u32 %v654, 7
      %v656 = vsub.s32 2, %v655
      %v657 = vrot.slane %v645, %v656
      %v658 = vlaneseq
      %v659 = vshrl.u32 %v658, 7
      %v660 = vsub.s32 3, %v659
      %v661 = vrot.slane %v645, %v660
      %vm662 = vcmp.eq.s32.totalorder %v649, 1
      %vm663 = vcmp.eq.s32.totalorder %v653, 1
      %vm664 = vcmp.eq.s32.totalorder %v657, 1
      %vm665 = vcmp.eq.s32.totalorder %v661, 1
      %v666 = vsel %vm662, %v644, %v307
      %v667 = vsel %vm663, %v637, %v313
      %v668 = vsel %vm664, %v638, %v308
      %v669 = vsel %vm665, %v639, %v314
      %v674 = vcombine.low %v666, %v667
      %v675 = vcombine.low %v668, %v669
      %v678 = vmax.f32 %v580, %v674
      %v679 = vmax.f32 %v581, %v675
      %s680 = scalar_lea.vmem %s1, 2
      %v681 = vld [vmem:[%s680] ss:$8 sm:$0xf]
      %682 = vrot.lane.b32.xlu0 %v476, 15
      %v683 = vpop.permute.xlu0 %682
      %685 = vrot.lane.b32.xlu0 %v473, 15
      %v686 = vpop.permute.xlu0 %685
      %687 = vrot.lane.b32.xlu0 %v474, 15
      %v688 = vpop.permute.xlu0 %687
      %689 = vrot.lane.b32.xlu0 %v475, 15
      %v690 = vpop.permute.xlu0 %689
      %vm691 = vcmask 121856
      %v692 = vsel %vm691, %v686, %v688
      %v693 = vsel %vm691, %v688, %v690
      %v694 = vsel %vm691, %v690, %v683
      %v699 = vsel %vm691, %v683, %v686
      %v701 = vlaneseq
      %v702 = vshrl.u32 %v701, 7
      %v703 = vsub.s32 0, %v702
      %v704 = vrot.slane %v681, %v703
      %v705 = vlaneseq
      %v706 = vshrl.u32 %v705, 7
      %v707 = vsub.s32 1, %v706
      %v708 = vrot.slane %v681, %v707
      %v709 = vlaneseq
      %v710 = vshrl.u32 %v709, 7
      %v711 = vsub.s32 2, %v710
      %v712 = vrot.slane %v681, %v711
      %v713 = vlaneseq
      %v714 = vshrl.u32 %v713, 7
      %v715 = vsub.s32 3, %v714
      %v716 = vrot.slane %v681, %v715
      %v721 = vmul.f32 %v699, %v704
      %v722 = vmul.f32 %v692, %v708
      %v723 = vmul.f32 %v693, %v712
      %v724 = vmul.f32 %v694, %v716
      %vm725 = vcmp.gt.f32.partialorder %v681, 0.5
      %726 = vrot.lane.b32.xlu0 %v314, 15
      %v727 = vpop.permute.xlu0 %726
      %729 = vrot.lane.b32.xlu0 %v307, 15
      %v730 = vpop.permute.xlu0 %729
      %731 = vrot.lane.b32.xlu0 %v313, 15
      %v732 = vpop.permute.xlu0 %731
      %733 = vrot.lane.b32.xlu0 %v308, 15
      %v734 = vpop.permute.xlu0 %733
      %v735 = vsel %vm691, %v730, %v732
      %v736 = vsel %vm691, %v732, %v734
      %v737 = vsel %vm691, %v734, %v727
      %v742 = vsel %vm691, %v727, %v730
      %v743 = vsel %vm725, 1, 0
      %v744 = vlaneseq
      %v745 = vshrl.u32 %v744, 7
      %v746 = vsub.s32 0, %v745
      %v747 = vrot.slane %v743, %v746
      %v748 = vlaneseq
      %v749 = vshrl.u32 %v748, 7
      %v750 = vsub.s32 1, %v749
      %v751 = vrot.slane %v743, %v750
      %v752 = vlaneseq
      %v753 = vshrl.u32 %v752, 7
      %v754 = vsub.s32 2, %v753
      %v755 = vrot.slane %v743, %v754
      %v756 = vlaneseq
      %v757 = vshrl.u32 %v756, 7
      %v758 = vsub.s32 3, %v757
      %v759 = vrot.slane %v743, %v758
      %vm760 = vcmp.eq.s32.totalorder %v747, 1
      %vm761 = vcmp.eq.s32.totalorder %v751, 1
      %vm762 = vcmp.eq.s32.totalorder %v755, 1
      %vm763 = vcmp.eq.s32.totalorder %v759, 1
      %v764 = vsel %vm760, %v742, %v307
      %v765 = vsel %vm761, %v735, %v313
      %v766 = vsel %vm762, %v736, %v308
      %v767 = vsel %vm763, %v737, %v314
      %v772 = vcombine.low %v764, %v765
      %v773 = vcombine.low %v766, %v767
      %v776 = vmax.f32 %v678, %v772
      %v777 = vmax.f32 %v679, %v773
      %s778 = scalar_lea.vmem %s1, 3
      %v779 = vld [vmem:[%s778] ss:$8 sm:$0xf]
      %780 = vrot.lane.b32.xlu0 %v476, 1
      %v781 = vpop.permute.xlu0 %780
      %783 = vrot.lane.b32.xlu0 %v473, 1
      %v784 = vpop.permute.xlu0 %783
      %785 = vrot.lane.b32.xlu0 %v474, 1
      %v786 = vpop.permute.xlu0 %785
      %787 = vrot.lane.b32.xlu0 %v475, 1
      %v788 = vpop.permute.xlu0 %787
      %vm789 = vcmask 7168
      %v790 = vsel %vm789, %v784, %v786
      %v791 = vsel %vm789, %v786, %v788
      %v792 = vsel %vm789, %v788, %v781
      %v797 = vsel %vm789, %v781, %v784
      %v799 = vlaneseq
      %v800 = vshrl.u32 %v799, 7
      %v801 = vsub.s32 0, %v800
      %v802 = vrot.slane %v779, %v801
      %v803 = vlaneseq
      %v804 = vshrl.u32 %v803, 7
      %v805 = vsub.s32 1, %v804
      %v806 = vrot.slane %v779, %v805
      %v807 = vlaneseq
      %v808 = vshrl.u32 %v807, 7
      %v809 = vsub.s32 2, %v808
      %v810 = vrot.slane %v779, %v809
      %v811 = vlaneseq
      %v812 = vshrl.u32 %v811, 7
      %v813 = vsub.s32 3, %v812
      %v814 = vrot.slane %v779, %v813
      %v819 = vmul.f32 %v797, %v802
      %v820 = vmul.f32 %v790, %v806
      %v821 = vmul.f32 %v791, %v810
      %v822 = vmul.f32 %v792, %v814
      %vm823 = vcmp.gt.f32.partialorder %v779, 0.5
      %824 = vrot.lane.b32.xlu0 %v314, 1
      %v825 = vpop.permute.xlu0 %824
      %827 = vrot.lane.b32.xlu0 %v307, 1
      %v828 = vpop.permute.xlu0 %827
      %829 = vrot.lane.b32.xlu0 %v313, 1
      %v830 = vpop.permute.xlu0 %829
      %831 = vrot.lane.b32.xlu0 %v308, 1
      %v832 = vpop.permute.xlu0 %831
      %v833 = vsel %vm789, %v828, %v830
      %v834 = vsel %vm789, %v830, %v832
      %v835 = vsel %vm789, %v832, %v825
      %v840 = vsel %vm789, %v825, %v828
      %v841 = vsel %vm823, 1, 0
      %v842 = vlaneseq
      %v843 = vshrl.u32 %v842, 7
      %v844 = vsub.s32 0, %v843
      %v845 = vrot.slane %v841, %v844
      %v846 = vlaneseq
      %v847 = vshrl.u32 %v846, 7
      %v848 = vsub.s32 1, %v847
      %v849 = vrot.slane %v841, %v848
      %v850 = vlaneseq
      %v851 = vshrl.u32 %v850, 7
      %v852 = vsub.s32 2, %v851
      %v853 = vrot.slane %v841, %v852
      %v854 = vlaneseq
      %v855 = vshrl.u32 %v854, 7
      %v856 = vsub.s32 3, %v855
      %v857 = vrot.slane %v841, %v856
      %vm858 = vcmp.eq.s32.totalorder %v845, 1
      %vm859 = vcmp.eq.s32.totalorder %v849, 1
      %vm860 = vcmp.eq.s32.totalorder %v853, 1
      %vm861 = vcmp.eq.s32.totalorder %v857, 1
      %v862 = vsel %vm858, %v840, %v307
      %v863 = vsel %vm859, %v833, %v313
      %v864 = vsel %vm860, %v834, %v308
      %v865 = vsel %vm861, %v835, %v314
      %v870 = vcombine.low %v862, %v863
      %v871 = vcombine.low %v864, %v865
      %v874 = vmax.f32 %v776, %v870
      %v875 = vmax.f32 %v777, %v871
      %s876 = scalar_lea.vmem %s1, 5
      %v877 = vld [vmem:[%s876] ss:$8 sm:$0xf]
      %878 = vrot.lane.b32.xlu0 %v473, 127
      %v879 = vpop.permute.xlu0 %878
      %880 = vrot.lane.b32.xlu0 %v474, 127
      %v881 = vpop.permute.xlu0 %880
      %882 = vrot.lane.b32.xlu0 %v475, 127
      %v883 = vpop.permute.xlu0 %882
      %884 = vrot.lane.b32.xlu0 %v476, 127
      %v885 = vpop.permute.xlu0 %884
      %vm886 = vcmask 1039360
      %v887 = vsel %vm886, %v879, %v881
      %v888 = vsel %vm886, %v881, %v883
      %v889 = vsel %vm886, %v883, %v885
      %v895 = vsel %vm886, %v885, %v879
      %v897 = vlaneseq
      %v898 = vshrl.u32 %v897, 7
      %v899 = vsub.s32 0, %v898
      %v900 = vrot.slane %v877, %v899
      %v901 = vlaneseq
      %v902 = vshrl.u32 %v901, 7
      %v903 = vsub.s32 1, %v902
      %v904 = vrot.slane %v877, %v903
      %v905 = vlaneseq
      %v906 = vshrl.u32 %v905, 7
      %v907 = vsub.s32 2, %v906
      %v908 = vrot.slane %v877, %v907
      %v909 = vlaneseq
      %v910 = vshrl.u32 %v909, 7
      %v911 = vsub.s32 3, %v910
      %v912 = vrot.slane %v877, %v911
      %v917 = vmul.f32 %v887, %v900
      %v918 = vmul.f32 %v888, %v904
      %v919 = vmul.f32 %v889, %v908
      %v920 = vmul.f32 %v895, %v912
      %vm921 = vcmp.gt.f32.partialorder %v877, 0.5
      %922 = vrot.lane.b32.xlu0 %v307, 127
      %v923 = vpop.permute.xlu0 %922
      %924 = vrot.lane.b32.xlu0 %v313, 127
      %v925 = vpop.permute.xlu0 %924
      %926 = vrot.lane.b32.xlu0 %v308, 127
      %v927 = vpop.permute.xlu0 %926
      %928 = vrot.lane.b32.xlu0 %v314, 127
      %v929 = vpop.permute.xlu0 %928
      %v930 = vsel %vm886, %v923, %v925
      %v931 = vsel %vm886, %v925, %v927
      %v932 = vsel %vm886, %v927, %v929
      %v938 = vsel %vm886, %v929, %v923
      %v939 = vsel %vm921, 1, 0
      %v940 = vlaneseq
      %v941 = vshrl.u32 %v940, 7
      %v942 = vsub.s32 0, %v941
      %v943 = vrot.slane %v939, %v942
      %v944 = vlaneseq
      %v945 = vshrl.u32 %v944, 7
      %v946 = vsub.s32 1, %v945
      %v947 = vrot.slane %v939, %v946
      %v948 = vlaneseq
      %v949 = vshrl.u32 %v948, 7
      %v950 = vsub.s32 2, %v949
      %v951 = vrot.slane %v939, %v950
      %v952 = vlaneseq
      %v953 = vshrl.u32 %v952, 7
      %v954 = vsub.s32 3, %v953
      %v955 = vrot.slane %v939, %v954
      %vm956 = vcmp.eq.s32.totalorder %v943, 1
      %vm957 = vcmp.eq.s32.totalorder %v947, 1
      %vm958 = vcmp.eq.s32.totalorder %v951, 1
      %vm959 = vcmp.eq.s32.totalorder %v955, 1
      %v960 = vsel %vm956, %v930, %v307
      %v961 = vsel %vm957, %v931, %v313
      %v962 = vsel %vm958, %v932, %v308
      %v963 = vsel %vm959, %v938, %v314
      %v968 = vcombine.low %v960, %v961
      %v969 = vcombine.low %v962, %v963
      %v972 = vmax.f32 %v874, %v968
      %v973 = vmax.f32 %v875, %v969
      %s974 = scalar_lea.vmem %s1, 6
      %v975 = vld [vmem:[%s974] ss:$8 sm:$0xf]
      %976 = vrot.lane.b32.xlu0 %v473, 113
      %v977 = vpop.permute.xlu0 %976
      %978 = vrot.lane.b32.xlu0 %v474, 113
      %v979 = vpop.permute.xlu0 %978
      %980 = vrot.lane.b32.xlu0 %v475, 113
      %v981 = vpop.permute.xlu0 %980
      %982 = vrot.lane.b32.xlu0 %v476, 113
      %v983 = vpop.permute.xlu0 %982
      %vm984 = vcmask 924672
      %v985 = vsel %vm984, %v977, %v979
      %v986 = vsel %vm984, %v979, %v981
      %v987 = vsel %vm984, %v981, %v983
      %v993 = vsel %vm984, %v983, %v977
      %v995 = vlaneseq
      %v996 = vshrl.u32 %v995, 7
      %v997 = vsub.s32 0, %v996
      %v998 = vrot.slane %v975, %v997
      %v999 = vlaneseq
      %v1000 = vshrl.u32 %v999, 7
      %v1001 = vsub.s32 1, %v1000
      %v1002 = vrot.slane %v975, %v1001
      %v1003 = vlaneseq
      %v1004 = vshrl.u32 %v1003, 7
      %v1005 = vsub.s32 2, %v1004
      %v1006 = vrot.slane %v975, %v1005
      %v1007 = vlaneseq
      %v1008 = vshrl.u32 %v1007, 7
      %v1009 = vsub.s32 3, %v1008
      %v1010 = vrot.slane %v975, %v1009
      %v1015 = vmul.f32 %v985, %v998
      %v1016 = vmul.f32 %v986, %v1002
      %v1017 = vmul.f32 %v987, %v1006
      %v1018 = vmul.f32 %v993, %v1010
      %vm1019 = vcmp.gt.f32.partialorder %v975, 0.5
      %1020 = vrot.lane.b32.xlu0 %v307, 113
      %v1021 = vpop.permute.xlu0 %1020
      %1022 = vrot.lane.b32.xlu0 %v313, 113
      %v1023 = vpop.permute.xlu0 %1022
      %1024 = vrot.lane.b32.xlu0 %v308, 113
      %v1025 = vpop.permute.xlu0 %1024
      %1026 = vrot.lane.b32.xlu0 %v314, 113
      %v1027 = vpop.permute.xlu0 %1026
      %v1028 = vsel %vm984, %v1021, %v1023
      %v1029 = vsel %vm984, %v1023, %v1025
      %v1030 = vsel %vm984, %v1025, %v1027
      %v1036 = vsel %vm984, %v1027, %v1021
      %v1037 = vsel %vm1019, 1, 0
      %v1038 = vlaneseq
      %v1039 = vshrl.u32 %v1038, 7
      %v1040 = vsub.s32 0, %v1039
      %v1041 = vrot.slane %v1037, %v1040
      %v1042 = vlaneseq
      %v1043 = vshrl.u32 %v1042, 7
      %v1044 = vsub.s32 1, %v1043
      %v1045 = vrot.slane %v1037, %v1044
      %v1046 = vlaneseq
      %v1047 = vshrl.u32 %v1046, 7
      %v1048 = vsub.s32 2, %v1047
      %v1049 = vrot.slane %v1037, %v1048
      %v1050 = vlaneseq
      %v1051 = vshrl.u32 %v1050, 7
      %v1052 = vsub.s32 3, %v1051
      %v1053 = vrot.slane %v1037, %v1052
      %vm1054 = vcmp.eq.s32.totalorder %v1041, 1
      %vm1055 = vcmp.eq.s32.totalorder %v1045, 1
      %vm1056 = vcmp.eq.s32.totalorder %v1049, 1
      %vm1057 = vcmp.eq.s32.totalorder %v1053, 1
      %v1058 = vsel %vm1054, %v1028, %v307
      %v1059 = vsel %vm1055, %v1029, %v313
      %v1060 = vsel %vm1056, %v1030, %v308
      %v1061 = vsel %vm1057, %v1036, %v314
      %v1066 = vcombine.low %v1058, %v1059
      %v1067 = vcombine.low %v1060, %v1061
      %v1070 = vmax.f32 %v972, %v1066
      %v1071 = vmax.f32 %v973, %v1067
      %s1072 = scalar_lea.vmem %s1, 7
      %v1073 = vld [vmem:[%s1072] ss:$8 sm:$0xf]
      %1074 = vrot.lane.b32.xlu0 %v473, 112
      %v1075 = vpop.permute.xlu0 %1074
      %1076 = vrot.lane.b32.xlu0 %v474, 112
      %v1077 = vpop.permute.xlu0 %1076
      %1078 = vrot.lane.b32.xlu0 %v475, 112
      %v1079 = vpop.permute.xlu0 %1078
      %1080 = vrot.lane.b32.xlu0 %v476, 112
      %v1081 = vpop.permute.xlu0 %1080
      %vm1082 = vcmask 916480
      %v1083 = vsel %vm1082, %v1075, %v1077
      %v1084 = vsel %vm1082, %v1077, %v1079
      %v1085 = vsel %vm1082, %v1079, %v1081
      %v1091 = vsel %vm1082, %v1081, %v1075
      %v1093 = vlaneseq
      %v1094 = vshrl.u32 %v1093, 7
      %v1095 = vsub.s32 0, %v1094
      %v1096 = vrot.slane %v1073, %v1095
      %v1097 = vlaneseq
      %v1098 = vshrl.u32 %v1097, 7
      %v1099 = vsub.s32 1, %v1098
      %v1100 = vrot.slane %v1073, %v1099
      %v1101 = vlaneseq
      %v1102 = vshrl.u32 %v1101, 7
      %v1103 = vsub.s32 2, %v1102
      %v1104 = vrot.slane %v1073, %v1103
      %v1105 = vlaneseq
      %v1106 = vshrl.u32 %v1105, 7
      %v1107 = vsub.s32 3, %v1106
      %v1108 = vrot.slane %v1073, %v1107
      %v1113 = vmul.f32 %v1083, %v1096
      %v1114 = vmul.f32 %v1084, %v1100
      %v1115 = vmul.f32 %v1085, %v1104
      %v1116 = vmul.f32 %v1091, %v1108
      %vm1117 = vcmp.gt.f32.partialorder %v1073, 0.5
      %1118 = vrot.lane.b32.xlu0 %v307, 112
      %v1119 = vpop.permute.xlu0 %1118
      %1120 = vrot.lane.b32.xlu0 %v313, 112
      %v1121 = vpop.permute.xlu0 %1120
      %1122 = vrot.lane.b32.xlu0 %v308, 112
      %v1123 = vpop.permute.xlu0 %1122
      %1124 = vrot.lane.b32.xlu0 %v314, 112
      %v1125 = vpop.permute.xlu0 %1124
      %v1126 = vsel %vm1082, %v1119, %v1121
      %v1127 = vsel %vm1082, %v1121, %v1123
      %v1128 = vsel %vm1082, %v1123, %v1125
      %v1134 = vsel %vm1082, %v1125, %v1119
      %v1135 = vsel %vm1117, 1, 0
      %v1136 = vlaneseq
      %v1137 = vshrl.u32 %v1136, 7
      %v1138 = vsub.s32 0, %v1137
      %v1139 = vrot.slane %v1135, %v1138
      %v1140 = vlaneseq
      %v1141 = vshrl.u32 %v1140, 7
      %v1142 = vsub.s32 1, %v1141
      %v1143 = vrot.slane %v1135, %v1142
      %v1144 = vlaneseq
      %v1145 = vshrl.u32 %v1144, 7
      %v1146 = vsub.s32 2, %v1145
      %v1147 = vrot.slane %v1135, %v1146
      %v1148 = vlaneseq
      %v1149 = vshrl.u32 %v1148, 7
      %v1150 = vsub.s32 3, %v1149
      %v1151 = vrot.slane %v1135, %v1150
      %vm1152 = vcmp.eq.s32.totalorder %v1139, 1
      %vm1153 = vcmp.eq.s32.totalorder %v1143, 1
      %vm1154 = vcmp.eq.s32.totalorder %v1147, 1
      %vm1155 = vcmp.eq.s32.totalorder %v1151, 1
      %v1156 = vsel %vm1152, %v1126, %v307
      %v1157 = vsel %vm1153, %v1127, %v313
      %v1158 = vsel %vm1154, %v1128, %v308
      %v1159 = vsel %vm1155, %v1134, %v314
      %v1164 = vcombine.low %v1156, %v1157
      %v1165 = vcombine.low %v1158, %v1159
      %v1168 = vmax.f32 %v1070, %v1164
      %v1169 = vmax.f32 %v1071, %v1165
      %s1170 = scalar_lea.vmem %s1, 32
      %v1171 = vld [vmem:[%s1170] ss:$8 sm:$0xf]
      %1172 = vrot.lane.b32.xlu0 %v473, 111
      %v1173 = vpop.permute.xlu0 %1172
      %1174 = vrot.lane.b32.xlu0 %v474, 111
      %v1175 = vpop.permute.xlu0 %1174
      %1176 = vrot.lane.b32.xlu0 %v475, 111
      %v1177 = vpop.permute.xlu0 %1176
      %1178 = vrot.lane.b32.xlu0 %v476, 111
      %v1179 = vpop.permute.xlu0 %1178
      %vm1180 = vcmask 908288
      %v1181 = vsel %vm1180, %v1173, %v1175
      %v1182 = vsel %vm1180, %v1175, %v1177
      %v1183 = vsel %vm1180, %v1177, %v1179
      %v1189 = vsel %vm1180, %v1179, %v1173
      %v1191 = vlaneseq
      %v1192 = vshrl.u32 %v1191, 7
      %v1193 = vsub.s32 0, %v1192
      %v1194 = vrot.slane %v1171, %v1193
      %v1195 = vlaneseq
      %v1196 = vshrl.u32 %v1195, 7
      %v1197 = vsub.s32 1, %v1196
      %v1198 = vrot.slane %v1171, %v1197
      %v1199 = vlaneseq
      %v1200 = vshrl.u32 %v1199, 7
      %v1201 = vsub.s32 2, %v1200
      %v1202 = vrot.slane %v1171, %v1201
      %v1203 = vlaneseq
      %v1204 = vshrl.u32 %v1203, 7
      %v1205 = vsub.s32 3, %v1204
      %v1206 = vrot.slane %v1171, %v1205
      %v1211 = vmul.f32 %v1181, %v1194
      %v1212 = vmul.f32 %v1182, %v1198
      %v1213 = vmul.f32 %v1183, %v1202
      %v1214 = vmul.f32 %v1189, %v1206
      %vm1215 = vcmp.gt.f32.partialorder %v1171, 0.5
      %1216 = vrot.lane.b32.xlu0 %v307, 111
      %v1217 = vpop.permute.xlu0 %1216
      %1218 = vrot.lane.b32.xlu0 %v313, 111
      %v1219 = vpop.permute.xlu0 %1218
      %1220 = vrot.lane.b32.xlu0 %v308, 111
      %v1221 = vpop.permute.xlu0 %1220
      %1222 = vrot.lane.b32.xlu0 %v314, 111
      %v1223 = vpop.permute.xlu0 %1222
      %v1224 = vsel %vm1180, %v1217, %v1219
      %v1225 = vsel %vm1180, %v1219, %v1221
      %v1226 = vsel %vm1180, %v1221, %v1223
      %v1232 = vsel %vm1180, %v1223, %v1217
      %v1233 = vsel %vm1215, 1, 0
      %v1234 = vlaneseq
      %v1235 = vshrl.u32 %v1234, 7
      %v1236 = vsub.s32 0, %v1235
      %v1237 = vrot.slane %v1233, %v1236
      %v1238 = vlaneseq
      %v1239 = vshrl.u32 %v1238, 7
      %v1240 = vsub.s32 1, %v1239
      %v1241 = vrot.slane %v1233, %v1240
      %v1242 = vlaneseq
      %v1243 = vshrl.u32 %v1242, 7
      %v1244 = vsub.s32 2, %v1243
      %v1245 = vrot.slane %v1233, %v1244
      %v1246 = vlaneseq
      %v1247 = vshrl.u32 %v1246, 7
      %v1248 = vsub.s32 3, %v1247
      %v1249 = vrot.slane %v1233, %v1248
      %vm1250 = vcmp.eq.s32.totalorder %v1237, 1
      %vm1251 = vcmp.eq.s32.totalorder %v1241, 1
      %vm1252 = vcmp.eq.s32.totalorder %v1245, 1
      %vm1253 = vcmp.eq.s32.totalorder %v1249, 1
      %v1254 = vsel %vm1250, %v1224, %v307
      %v1255 = vsel %vm1251, %v1225, %v313
      %v1256 = vsel %vm1252, %v1226, %v308
      %v1257 = vsel %vm1253, %v1232, %v314
      %v1262 = vcombine.low %v1254, %v1255
      %v1263 = vcombine.low %v1256, %v1257
      %v1266 = vmax.f32 %v1168, %v1262
      %v1267 = vmax.f32 %v1169, %v1263
      %v1270 = vcombine.high %v1266, %v1266
      %v1271 = vcombine.high %v1267, %v1267
      %v1274 = vld [vmem:[%s5] sm:$0xf]
      %v1275 = vld [vmem:[%s5 + $0x4] sm:$0xf]
      %v1276 = vld [vmem:[%s5 + $0x8] sm:$0xf]
      %v1277 = vpack.c.bf16 %v623, %v525
      %v1278 = vpack.c.bf16 %v624, %v526
      %v1279 = vpack.c.bf16 %v625, %v527
      %v1280 = vpack.c.bf16 %v626, %v528
      %v1281 = vpack.c.bf16 %v819, %v721
      %v1282 = vpack.c.bf16 %v820, %v722
      %v1283 = vpack.c.bf16 %v821, %v723
      %v1284 = vpack.c.bf16 %v822, %v724
      %v1285 = vpack.c.bf16 %v917, %v473
      %v1286 = vpack.c.bf16 %v918, %v474
      %v1287 = vpack.c.bf16 %v919, %v475
      %v1288 = vpack.c.bf16 %v920, %v476
      %v1289 = vpack.c.bf16 %v1113, %v1015
      %v1290 = vpack.c.bf16 %v1114, %v1016
      %v1291 = vpack.c.bf16 %v1115, %v1017
      %v1292 = vpack.c.bf16 %v1116, %v1018
      %v1293 = vpack.c.bf16 %v1266, %v1211
      %v1294 = vpack.c.bf16 %v1270, %v1212
      %v1295 = vpack.c.bf16 %v1267, %v1213
      %v1296 = vpack.c.bf16 %v1271, %v1214
      %v1300 = vunpack.c.l.b16 %v1274
      %v1301 = vunpack.c.l.b16 %v1275
      %v1302 = vunpack.c.l.b16 %v1276
      %v1303 = vpack.c.b16 %v1301, %v1300
      %v1304 = vpack.c.b16 %v1302, %v1302
      %vm1305 = vcmask 621568
      %v1307 = vsel %vm1305, %v1303, 0
      %v1310 = vsel %vm1305, %v1304, 0
      %vm1312 = vcmask 1045504
      %v1314 = vsel %vm1312, %v1293, 0
      %v1317 = vsel %vm1312, %v1294, 0
      %v1320 = vsel %vm1312, %v1295, 0
      %v1323 = vsel %vm1312, %v1296, 0
      %1325 = vmatprep.subr.bf16.mxu0 %v1278
      %1326 = vmatpush1.bf16.msra.mxu0 %v1277
      %1327 = vmatprep.subr.bf16.mxu0 %v1282
      %1328 = vmatpush1.bf16.msra.mxu0 %v1281
      %1329 = vmatprep.subr.bf16.mxu0 %v1286
      %1330 = vmatpush1.bf16.msra.mxu0 %v1285
      %1331 = vmatprep.subr.bf16.mxu0 %v1290
      %1332 = vmatpush1.bf16.msra.mxu0 %v1289
      %1333 = vmatprep.subr.bf16.mxu0 %v1317
      %1334 = vmatpush1.bf16.msra.mxu0 %v1314
      %1335 = vmatprep.subr.bf16.mxu0 0
      %1336 = vmatpush1.bf16.msra.mxu0 0
      %1337 = vmatprep.subr.bf16.mxu0 0
      %1338 = vmatpush1.bf16.msra.mxu0 0
      %1339 = vmatprep.subr.bf16.mxu0 0
      %1340 = vmatpush1.bf16.msra.mxu0 0
      %1341 = vmatprep.subr.bf16.mxu0 0
      %1342 = vmatpush1.bf16.msra.mxu0 0
      %1343 = vmatprep.subr.bf16.mxu0 0
      %1344 = vmatpush1.bf16.msra.mxu0 0
      %1345 = vmatprep.subr.bf16.mxu0 0
      %1346 = vmatpush1.bf16.msra.mxu0 0
      %1347 = vmatprep.subr.bf16.mxu0 0
      %1348 = vmatpush1.bf16.msra.mxu0 0
      %1349 = vmatprep.subr.bf16.mxu0 0
      %1350 = vmatpush1.bf16.msra.mxu0 0
      %1351 = vmatprep.subr.bf16.mxu0 0
      %1352 = vmatpush1.bf16.msra.mxu0 0
      %1353 = vmatprep.subr.bf16.mxu0 0
      %1354 = vmatpush1.bf16.msra.mxu0 0
      %1355 = vmatprep.subr.bf16.mxu0 0
      %1356 = vmatpush1.bf16.msra.mxu0 0
      %1357 = vmatprep.mubr.bf16.mxu0 0
      %1358 = vmatmul.mubr.bf16.gmra.mrb[0].mxu0 %v1307
      %v1359 = vpop.f32.mrb[0].mxu0
      %v1360 = vadd.f32 0.0, %v1359
      %v1361 = vpop.f32.mrb[0].mxu0
      %v1362 = vadd.f32 0.0, %v1361
      %v1363 = vpop.f32.mrb[0].mxu0
      %v1364 = vadd.f32 0.0, %v1363
      %v1365 = vpop.f32.mrb[0].mxu0
      %v1366 = vadd.f32 0.0, %v1365
      %1367 = vmatprep.mubr.bf16.mxu0 0
      %1368 = vmatmul.mubr.bf16.gmra.mrb[0].mxu0 %v1310
      %v1369 = vpop.f32.mrb[0].mxu0
      %v1370 = vadd.f32 0.0, %v1369
      %v1371 = vpop.f32.mrb[0].mxu0
      %v1372 = vadd.f32 0.0, %v1371
      %v1373 = vpop.f32.mrb[0].mxu0
      %v1374 = vpop.f32.mrb[0].mxu0
      %1375 = vdwg.mxu0
      %1376 = vmatprep.subr.bf16.mxu0 %v1280
      %1377 = vmatpush1.bf16.msra.mxu0 %v1279
      %1378 = vmatprep.subr.bf16.mxu0 %v1284
      %1379 = vmatpush1.bf16.msra.mxu0 %v1283
      %1380 = vmatprep.subr.bf16.mxu0 %v1288
      %1381 = vmatpush1.bf16.msra.mxu0 %v1287
      %1382 = vmatprep.subr.bf16.mxu0 %v1292
      %1383 = vmatpush1.bf16.msra.mxu0 %v1291
      %1384 = vmatprep.subr.bf16.mxu0 %v1323
      %1385 = vmatpush1.bf16.msra.mxu0 %v1320
      %1386 = vmatprep.subr.bf16.mxu0 0
      %1387 = vmatpush1.bf16.msra.mxu0 0
      %1388 = vmatprep.subr.bf16.mxu0 0
      %1389 = vmatpush1.bf16.msra.mxu0 0
      %1390 = vmatprep.subr.bf16.mxu0 0
      %1391 = vmatpush1.bf16.msra.mxu0 0
      %1392 = vmatprep.subr.bf16.mxu0 0
      %1393 = vmatpush1.bf16.msra.mxu0 0
      %1394 = vmatprep.subr.bf16.mxu0 0
      %1395 = vmatpush1.bf16.msra.mxu0 0
      %1396 = vmatprep.subr.bf16.mxu0 0
      %1397 = vmatpush1.bf16.msra.mxu0 0
      %1398 = vmatprep.subr.bf16.mxu0 0
      %1399 = vmatpush1.bf16.msra.mxu0 0
      %1400 = vmatprep.subr.bf16.mxu0 0
      %1401 = vmatpush1.bf16.msra.mxu0 0
      %1402 = vmatprep.subr.bf16.mxu0 0
      %1403 = vmatpush1.bf16.msra.mxu0 0
      %1404 = vmatprep.subr.bf16.mxu0 0
      %1405 = vmatpush1.bf16.msra.mxu0 0
      %1406 = vmatprep.subr.bf16.mxu0 0
      %1407 = vmatpush1.bf16.msra.mxu0 0
      %1408 = vmatprep.mubr.bf16.mxu0 0
      %1409 = vmatmul.mubr.bf16.gmra.mrb[0].mxu0 %v1307
      %v1410 = vpop.f32.mrb[0].mxu0
      %v1411 = vadd.f32 0.0, %v1410
      %v1412 = vpop.f32.mrb[0].mxu0
      %v1413 = vadd.f32 0.0, %v1412
      %v1414 = vpop.f32.mrb[0].mxu0
      %v1415 = vadd.f32 0.0, %v1414
      %v1416 = vpop.f32.mrb[0].mxu0
      %v1417 = vadd.f32 0.0, %v1416
      %1418 = vmatprep.mubr.bf16.mxu0 0
      %1419 = vmatmul.mubr.bf16.gmra.mrb[0].mxu0 %v1310
      %v1420 = vpop.f32.mrb[0].mxu0
      %v1421 = vadd.f32 0.0, %v1420
      %v1422 = vpop.f32.mrb[0].mxu0
      %v1423 = vadd.f32 0.0, %v1422
      %v1424 = vpop.f32.mrb[0].mxu0
      %v1425 = vpop.f32.mrb[0].mxu0
      %1426 = vdwg.mxu0
      %v1427 = vld [vmem:[%s6] sm:$0xff]
      %v1428 = vld [vmem:[%s6 + $0x8] sm:$0xff]
      %v1429 = vld [vmem:[%s6 + $0x10] sm:$0xff]
      %1431 = vset.pattern.permute.xlu0 0
      %1432 = vperm.xlu0 %1431, %v1427
      %v1433 = vpop.permute.xlu0 %1432
      %1436 = vset.pattern.permute.xlu0 0
      %1437 = vperm.xlu0 %1436, %v1428
      %v1438 = vpop.permute.xlu0 %1437
      %1441 = vset.pattern.permute.xlu0 0
      %1442 = vperm.xlu0 %1441, %v1429
      %v1443 = vpop.permute.xlu0 %1442
      %v1445 = vmul.f32 %v1360, %v1433
      %v1446 = vmul.f32 %v1362, %v1433
      %v1447 = vmul.f32 %v1411, %v1433
      %v1448 = vmul.f32 %v1413, %v1433
      %v1449 = vmul.f32 %v1364, %v1438
      %v1450 = vmul.f32 %v1366, %v1438
      %v1451 = vmul.f32 %v1415, %v1438
      %v1452 = vmul.f32 %v1417, %v1438
      %v1453 = vmul.f32 %v1370, %v1443
      %v1454 = vmul.f32 %v1372, %v1443
      %v1455 = vmul.f32 %v1421, %v1443
      %v1456 = vmul.f32 %v1423, %v1443
      %v1457 = vld [vmem:[%s7] sm:$0xff]
      %v1458 = vld [vmem:[%s7 + $0x8] sm:$0xff]
      %v1459 = vld [vmem:[%s7 + $0x10] sm:$0xff]
      %1461 = vset.pattern.permute.xlu0 0
      %1462 = vperm.xlu0 %1461, %v1457
      %v1463 = vpop.permute.xlu0 %1462
      %1466 = vset.pattern.permute.xlu0 0
      %1467 = vperm.xlu0 %1466, %v1458
      %v1468 = vpop.permute.xlu0 %1467
      %1471 = vset.pattern.permute.xlu0 0
      %1472 = vperm.xlu0 %1471, %v1459
      %v1473 = vpop.permute.xlu0 %1472
      %v1475 = vadd.f32 %v1445, %v1463
      %v1476 = vadd.f32 %v1446, %v1463
      %v1477 = vadd.f32 %v1447, %v1463
      %v1478 = vadd.f32 %v1448, %v1463
      %v1479 = vadd.f32 %v1449, %v1468
      %v1480 = vadd.f32 %v1450, %v1468
      %v1481 = vadd.f32 %v1451, %v1468
      %v1482 = vadd.f32 %v1452, %v1468
      %v1483 = vadd.f32 %v1453, %v1473
      %v1484 = vadd.f32 %v1454, %v1473
      %v1485 = vadd.f32 %v1455, %v1473
      %v1486 = vadd.f32 %v1456, %v1473
      %v1487 = vmax.f32 %v1475, 0.0
      %v1488 = vmax.f32 %v1476, 0.0
      %v1489 = vmax.f32 %v1477, 0.0
      %v1490 = vmax.f32 %v1478, 0.0
      %v1491 = vmax.f32 %v1479, 0.0
      %v1492 = vmax.f32 %v1480, 0.0
      %v1493 = vmax.f32 %v1481, 0.0
      %v1494 = vmax.f32 %v1482, 0.0
      %v1495 = vmax.f32 %v1483, 0.0
      %v1496 = vmax.f32 %v1484, 0.0
      %v1497 = vmax.f32 %v1485, 0.0
      %v1498 = vmax.f32 %v1486, 0.0
      %1499 = vst [vmem:[%s305 + $0x20] sm:$0xff] %v1487
      %1500 = vst [vmem:[%s305 + $0x28] sm:$0xff] %v1488
      %1501 = vst [vmem:[%s305 + $0x30] sm:$0xff] %v1489
      %1502 = vst [vmem:[%s305 + $0x38] sm:$0xff] %v1490
      %1503 = vst [vmem:[%s305 + $0x40] sm:$0xff] %v1491
      %1504 = vst [vmem:[%s305 + $0x48] sm:$0xff] %v1492
      %1505 = vst [vmem:[%s305 + $0x50] sm:$0xff] %v1493
      %1506 = vst [vmem:[%s305 + $0x58] sm:$0xff] %v1494
      %1507 = vst [vmem:[%s305 + $0x60] sm:$0xff] %v1495
      %1508 = vst [vmem:[%s305 + $0x68] sm:$0xff] %v1496
      %1509 = vst [vmem:[%s305 + $0x70] sm:$0xff] %v1497
      %1510 = vst [vmem:[%s305 + $0x78] sm:$0xff] %v1498
      %p1511 = scmp.lt.s32.totalorder %s19, 1
      %s1512 = scalar_select %p1511, %s19, 1
      %s1513 = smul.addr %s1512, 16
      %s1514 = smul.addr %s1513, 8
      %s1515 = scalar_lea.vmem %s8, %s1514
      // Predicated region
      $region53: #{inception_forward.1} parent=51 // pred_check
        %p1516 = pneg %p210
      $region54: #{inception_forward.1} parent=51 // pred_check_branch
        %1518 = sbr.rel (%p1516) target = $region56
      $region55: #{inception_forward.1} parent=51 // pred_region
        _
      $region56: #{inception_forward.1} parent=51 // pred_fallthru
        _
    $region52: #{inception_forward.1} parent=5 // pred_fallthru
      _
    %p1519 = scmp.le.s32.totalorder 2, %s14
    // Predicated region
    $region57: #{inception_forward.1} parent=5 // pred_check
      %p1520 = pneg %p1519
    $region58: #{inception_forward.1} parent=5 // pred_check_branch
      %1522 = sbr.rel (%p1520) target = $region60
    $region59: #{inception_forward.1} parent=5 // pred_region
      %s1523 = ssub.s32 %s14, 2
      // Predicated region
      $region61: #{inception_forward.1} parent=59 // pred_check
        %p1524 = pneg %p216
      $region62: #{inception_forward.1} parent=59 // pred_check_branch
        %1526 = sbr.rel (%p1524) target = $region64
      $region63: #{inception_forward.1} parent=59 // pred_region
        %p1527 = scmp.lt.s32.totalorder %s20, 1
        %s1528 = scalar_select %p1527, %s20, 1
        %s1529 = smul.addr %s1528, 16
        %s1530 = smul.addr %s1529, 8
        %s1531 = scalar_lea.vmem %s8, %s1530
      $region64: #{inception_forward.1} parent=59 // pred_fallthru
        _
    $region60: #{inception_forward.1} parent=5 // pred_fallthru
      _
  $region6: #{inception_forward.1} parent=0 // loop_footer
    %s18 = sadd.s32 1, %s14
  $region7: #{inception_forward.1} parent=0 // loop_footer_branch
    %13 = sbr.rel target = $region3
  $region8: #{inception_forward.1} parent=0 // loop_exit
    _

</llo_original>
